<compile_context>
chip_gen: v7x
topology: tpu7x:2x2x1
jax: 0.10.0
libtpu: 0.0.40
codegen_flags: <defaults>
</compile_context>

<pallas_src>
import math
import jax
import jax.numpy as jnp
import numpy as np
from jax.experimental import pallas as pl
from jax.experimental.pallas import tpu as pltpu

# ---- config (small synthetic shapes, matching the PyTorch module) ----
B = 2
T = 8
N_EMBD = 32
N_HEAD = 4
HEAD_DIM = N_EMBD // N_HEAD
LN_EPS = 1e-5


def _layernorm(x, w, b):
    mu = jnp.mean(x, axis=-1, keepdims=True)
    var = jnp.mean((x - mu) ** 2, axis=-1, keepdims=True)
    return (x - mu) * jax.lax.rsqrt(var + LN_EPS) * w + b


def _gelu_tanh(x):
    # GELU(approximate='tanh')
    c = math.sqrt(2.0 / math.pi)
    return 0.5 * x * (1.0 + jnp.tanh(c * (x + 0.044715 * x * x * x)))


def block_kernel(
    x_ref, mask_ref, slab_ref,
    w_qkv_ref, w_attn_proj_ref, w_fc_ref, w_mlp_proj_ref,
    o_ref,
    y_buf,                                  # VMEM scratch (BT, C): merged head outputs
):
    # Single invocation: everything (activations + all weights) lives in VMEM.
    C = N_EMBD
    D = HEAD_DIM
    x = x_ref[...]                          # (BT, C)

    # Packed per-row parameters: one (8, 4C) slab, sliced by row.
    ln1_w = slab_ref[0:1, 0:C]
    ln1_b = slab_ref[1:2, 0:C]
    ln2_w = slab_ref[2:3, 0:C]
    ln2_b = slab_ref[3:4, 0:C]
    b_ap = slab_ref[4:5, 0:C]
    b_mp = slab_ref[5:6, 0:C]
    b_fc = slab_ref[6:7, :]                 # (1, 4C)
    b_qkv = slab_ref[7:8, 0:3 * C]          # (1, 3C)

    # ---------------- attention branch ----------------
    h1 = _layernorm(x, ln1_w, ln1_b)                                        # (BT, C)
    qkv = jnp.dot(h1, w_qkv_ref[...],
                  preferred_element_type=jnp.float32) + b_qkv               # (BT, 3C)

    mask_add = mask_ref[...]                # (BT, BT): 0 allowed / -1e30 masked
    scale = 1.0 / math.sqrt(D)

    # Heads are a short static unroll (kept 2-D to avoid sub-tile 4-D relayouts).
    # Each head writes its D-lane slice of y_buf; the head merge + output projection
    # then happens as ONE K=C matmul after the loop.
    for hd in range(N_HEAD):
        lo = hd * D
        qh = qkv[:, lo:lo + D]                       # (BT, D)
        kh = qkv[:, C + lo:C + lo + D]               # (BT, D)
        vh = qkv[:, 2 * C + lo:2 * C + lo + D]       # (BT, D)

        # scores: contract last axis of q and k directly (no explicit transpose)
        s = jax.lax.dot_general(
            qh, kh, (((1,), (1,)), ((), ())),
            preferred_element_type=jnp.float32) * scale + mask_add          # (BT, BT)
        # No row-max subtraction: logits are O(1) and the -1e30 mask underflows
        # exp to exactly 0, so the softmax is well-conditioned without it.
        p = jnp.exp(s)
        l = jnp.sum(p, axis=-1, keepdims=True)                              # (BT, 1)
        y_buf[:, lo:lo + D] = jnp.dot(p, vh,
                                      preferred_element_type=jnp.float32) / l

    attn = jnp.dot(y_buf[...], w_attn_proj_ref[...],
                   preferred_element_type=jnp.float32) + b_ap               # (BT, C)
    x1 = x + attn                            # residual 1

    # ---------------- MLP branch ----------------
    h2 = _layernorm(x1, ln2_w, ln2_b)
    f = jnp.dot(h2, w_fc_ref[...],
                preferred_element_type=jnp.float32) + b_fc                  # (BT, 4C)
    f = _gelu_tanh(f)
    m = jnp.dot(f, w_mlp_proj_ref[...],
                preferred_element_type=jnp.float32) + b_mp                  # (BT, C)

    o_ref[...] = x1 + m                      # residual 2


def _block_causal_additive_mask(Bn, Tn):
    # Hoisted out of the kernel: 0 where attention is allowed (same sequence AND
    # key position <= query position), -1e30 elsewhere (handles the folded batch).
    r = np.arange(Bn * Tn)
    same_seq = (r[:, None] // Tn) == (r[None, :] // Tn)
    causal = r[:, None] >= r[None, :]
    allow = same_seq & causal
    return jnp.asarray(np.where(allow, 0.0, -1e30), dtype=jnp.float32)


def _pack_param_slab(params):
    # Pack all (1, k*C) row-parameters into one (8, 4C) f32 slab — exactly one
    # (8, 128) VMEM tile — leaving only the four big weight matrices as operands.
    (ln1_w, ln1_b, w_qkv, b_qkv, w_ap, b_ap,
     ln2_w, ln2_b, w_fc, b_fc, w_mp, b_mp) = params
    C = N_EMBD
    slab = np.zeros((8, 4 * C), np.float32)
    slab[0, :C] = np.asarray(ln1_w).reshape(-1)
    slab[1, :C] = np.asarray(ln1_b).reshape(-1)
    slab[2, :C] = np.asarray(ln2_w).reshape(-1)
    slab[3, :C] = np.asarray(ln2_b).reshape(-1)
    slab[4, :C] = np.asarray(b_ap).reshape(-1)
    slab[5, :C] = np.asarray(b_mp).reshape(-1)
    slab[6, :] = np.asarray(b_fc).reshape(-1)
    slab[7, :3 * C] = np.asarray(b_qkv).reshape(-1)
    return jnp.asarray(slab), (w_qkv, w_ap, w_fc, w_mp)


def gpt_block(x, params):
    Bn, Tn, Cn = x.shape
    BT = Bn * Tn
    x2 = x.reshape(BT, Cn)                           # free reshape in the wrapper
    mask_add = _block_causal_additive_mask(Bn, Tn)   # (BT, BT) constant input
    slab, weights = _pack_param_slab(params)

    out = pl.pallas_call(
        block_kernel,
        out_shape=jax.ShapeDtypeStruct((BT, Cn), jnp.float32),
        scratch_shapes=[pltpu.VMEM((BT, Cn), jnp.float32)],
        compiler_params=pltpu.CompilerParams(
            vmem_limit_bytes=32 * 1024 * 1024),
    )(x2, mask_add, slab, *weights)
    return out.reshape(Bn, Tn, Cn)


def init_params(key):
    C = N_EMBD
    ks = jax.random.split(key, 8)
    scale = 0.02
    ln1_w = jnp.ones((1, C), jnp.float32)
    ln1_b = jnp.zeros((1, C), jnp.float32)
    w_qkv = scale * jax.random.normal(ks[0], (C, 3 * C), jnp.float32)
    b_qkv = jnp.zeros((1, 3 * C), jnp.float32)
    w_ap = scale * jax.random.normal(ks[1], (C, C), jnp.float32)
    b_ap = jnp.zeros((1, C), jnp.float32)
    ln2_w = jnp.ones((1, C), jnp.float32)
    ln2_b = jnp.zeros((1, C), jnp.float32)
    w_fc = scale * jax.random.normal(ks[2], (C, 4 * C), jnp.float32)
    b_fc = jnp.zeros((1, 4 * C), jnp.float32)
    w_mp = scale * jax.random.normal(ks[3], (4 * C, C), jnp.float32)
    b_mp = jnp.zeros((1, C), jnp.float32)
    return (ln1_w, ln1_b, w_qkv, b_qkv, w_ap, b_ap,
            ln2_w, ln2_b, w_fc, b_fc, w_mp, b_mp)


def reference_block(x, params):
    (ln1_w, ln1_b, w_qkv, b_qkv, w_ap, b_ap,
     ln2_w, ln2_b, w_fc, b_fc, w_mp, b_mp) = params
    Bn, Tn, Cn = x.shape

    def ln(v, w, b):
        mu = jnp.mean(v, axis=-1, keepdims=True)
        var = jnp.mean((v - mu) ** 2, axis=-1, keepdims=True)
        return (v - mu) * jax.lax.rsqrt(var + LN_EPS) * w + b

    h = ln(x, ln1_w, ln1_b)
    qkv = h @ w_qkv + b_qkv
    q, k, v = jnp.split(qkv, 3, axis=-1)
    q = q.reshape(Bn, Tn, N_HEAD, HEAD_DIM).transpose(0, 2, 1, 3)
    k = k.reshape(Bn, Tn, N_HEAD, HEAD_DIM).transpose(0, 2, 1, 3)
    v = v.reshape(Bn, Tn, N_HEAD, HEAD_DIM).transpose(0, 2, 1, 3)
    s = jnp.einsum("bhqd,bhkd->bhqk", q, k) / math.sqrt(HEAD_DIM)
    mask = jnp.tril(jnp.ones((Tn, Tn), bool))
    s = jnp.where(mask, s, -1e30)
    p = jax.nn.softmax(s, axis=-1)
    y = jnp.einsum("bhqk,bhkd->bhqd", p, v).transpose(0, 2, 1, 3).reshape(Bn, Tn, Cn)
    y = y @ w_ap + b_ap
    x1 = x + y
    h2 = ln(x1, ln2_w, ln2_b)
    f = h2 @ w_fc + b_fc
    c = math.sqrt(2.0 / math.pi)
    f = 0.5 * f * (1.0 + jnp.tanh(c * (f + 0.044715 * f ** 3)))
    return x1 + (f @ w_mp + b_mp)


if __name__ == "__main__":
    key = jax.random.PRNGKey(0)
    kx, kp = jax.random.split(key)
    x = jax.random.normal(kx, (B, T, N_EMBD), jnp.float32)
    params = init_params(kp)

    out = gpt_block(x, params)
    out = jax.block_until_ready(out)

    ref = reference_block(x, params)
    assert out.shape == (B, T, N_EMBD)
    # Exact softmax denominator (no approx reciprocal) -> tight tolerance restored.
    assert jnp.allclose(out, ref, atol=1e-4, rtol=1e-4), float(jnp.max(jnp.abs(out - ref)))
    print("KERNEL_OK")
</pallas_src>

<mosaic_0001>
module attributes {stable_mosaic.version = 11 : i64} {
  func.func @block_kernel(%arg0: memref<16x32xf32, #tpu.memory_space<vmem>>, %arg1: memref<16x16xf32, #tpu.memory_space<vmem>>, %arg2: memref<8x128xf32, #tpu.memory_space<vmem>>, %arg3: memref<32x96xf32, #tpu.memory_space<vmem>>, %arg4: memref<32x32xf32, #tpu.memory_space<vmem>>, %arg5: memref<32x128xf32, #tpu.memory_space<vmem>>, %arg6: memref<128x32xf32, #tpu.memory_space<vmem>>, %arg7: memref<16x32xf32, #tpu.memory_space<vmem>>, %arg8: memref<16x32xf32, #tpu.memory_space<vmem>>) attributes {dimension_semantics = [], scalar_prefetch = 0 : i64, scratch_operands = 1 : i64, tpu.core_type = #tpu.core_type<tc>} {
    %c0 = arith.constant 0 : index
    %c0_0 = arith.constant 0 : index
    %0 = vector.load %arg0[%c0, %c0_0] : memref<16x32xf32, #tpu.memory_space<vmem>>, vector<16x32xf32>
    %c0_1 = arith.constant 0 : index
    %c0_2 = arith.constant 0 : index
    %1 = vector.load %arg2[%c0_1, %c0_2] : memref<8x128xf32, #tpu.memory_space<vmem>>, vector<1x32xf32>
    %c1 = arith.constant 1 : index
    %c0_3 = arith.constant 0 : index
    %2 = vector.load %arg2[%c1, %c0_3] : memref<8x128xf32, #tpu.memory_space<vmem>>, vector<1x32xf32>
    %c2 = arith.constant 2 : index
    %c0_4 = arith.constant 0 : index
    %3 = vector.load %arg2[%c2, %c0_4] : memref<8x128xf32, #tpu.memory_space<vmem>>, vector<1x32xf32>
    %c3 = arith.constant 3 : index
    %c0_5 = arith.constant 0 : index
    %4 = vector.load %arg2[%c3, %c0_5] : memref<8x128xf32, #tpu.memory_space<vmem>>, vector<1x32xf32>
    %c4 = arith.constant 4 : index
    %c0_6 = arith.constant 0 : index
    %5 = vector.load %arg2[%c4, %c0_6] : memref<8x128xf32, #tpu.memory_space<vmem>>, vector<1x32xf32>
    %c5 = arith.constant 5 : index
    %c0_7 = arith.constant 0 : index
    %6 = vector.load %arg2[%c5, %c0_7] : memref<8x128xf32, #tpu.memory_space<vmem>>, vector<1x32xf32>
    %c6 = arith.constant 6 : index
    %c0_8 = arith.constant 0 : index
    %7 = vector.load %arg2[%c6, %c0_8] : memref<8x128xf32, #tpu.memory_space<vmem>>, vector<1x128xf32>
    %c7 = arith.constant 7 : index
    %c0_9 = arith.constant 0 : index
    %8 = vector.load %arg2[%c7, %c0_9] : memref<8x128xf32, #tpu.memory_space<vmem>>, vector<1x96xf32>
    %cst = arith.constant dense<0.000000e+00> : vector<16xf32>
    %9 = vector.multi_reduction <add>, %0, %cst [1] : vector<16x32xf32> to vector<16xf32>
    %10 = vector.shape_cast %9 : vector<16xf32> to vector<16x1xf32>
    %cst_10 = arith.constant 3.200000e+01 : f32
    %11 = vector.broadcast %cst_10 : f32 to vector<16x1xf32>
    %12 = arith.divf %10, %11 : vector<16x1xf32>
    %13 = vector.broadcast %12 : vector<16x1xf32> to vector<16x32xf32>
    %14 = arith.subf %0, %13 : vector<16x32xf32>
    %15 = arith.mulf %14, %14 : vector<16x32xf32>
    %cst_11 = arith.constant dense<0.000000e+00> : vector<16xf32>
    %16 = vector.multi_reduction <add>, %15, %cst_11 [1] : vector<16x32xf32> to vector<16xf32>
    %17 = vector.shape_cast %16 : vector<16xf32> to vector<16x1xf32>
    %cst_12 = arith.constant 3.200000e+01 : f32
    %18 = vector.broadcast %cst_12 : f32 to vector<16x1xf32>
    %19 = arith.divf %17, %18 : vector<16x1xf32>
    %20 = vector.broadcast %12 : vector<16x1xf32> to vector<16x32xf32>
    %21 = arith.subf %0, %20 : vector<16x32xf32>
    %cst_13 = arith.constant 9.99999974E-6 : f32
    %22 = vector.broadcast %cst_13 : f32 to vector<16x1xf32>
    %23 = arith.addf %19, %22 : vector<16x1xf32>
    %24 = math.rsqrt %23 : vector<16x1xf32>
    %25 = vector.broadcast %24 : vector<16x1xf32> to vector<16x32xf32>
    %26 = arith.mulf %21, %25 : vector<16x32xf32>
    %27 = vector.broadcast %1 : vector<1x32xf32> to vector<16x32xf32>
    %28 = arith.mulf %26, %27 : vector<16x32xf32>
    %29 = vector.broadcast %2 : vector<1x32xf32> to vector<16x32xf32>
    %30 = arith.addf %28, %29 : vector<16x32xf32>
    %c0_14 = arith.constant 0 : index
    %c0_15 = arith.constant 0 : index
    %31 = vector.load %arg3[%c0_14, %c0_15] : memref<32x96xf32, #tpu.memory_space<vmem>>, vector<32x96xf32>
    %cst_16 = arith.constant dense<0.000000e+00> : vector<16x96xf32>
    %32 = tpu.matmul %30, %31, %cst_16 {dimension_numbers = #tpu.dot_dimension_numbers<[1], [0], [0], [1], [0, 0, 1, 1], [], []>} : vector<16x32xf32>, vector<32x96xf32>, vector<16x96xf32> -> vector<16x96xf32>
    %33 = vector.broadcast %8 : vector<1x96xf32> to vector<16x96xf32>
    %34 = arith.addf %32, %33 : vector<16x96xf32>
    %c0_17 = arith.constant 0 : index
    %c0_18 = arith.constant 0 : index
    %35 = vector.load %arg1[%c0_17, %c0_18] : memref<16x16xf32, #tpu.memory_space<vmem>>, vector<16x16xf32>
    %36 = vector.extract_strided_slice %34 {offsets = [0, 0], sizes = [16, 8], strides = [1, 1]} : vector<16x96xf32> to vector<16x8xf32>
    %37 = vector.extract_strided_slice %34 {offsets = [0, 32], sizes = [16, 8], strides = [1, 1]} : vector<16x96xf32> to vector<16x8xf32>
    %38 = vector.extract_strided_slice %34 {offsets = [0, 64], sizes = [16, 8], strides = [1, 1]} : vector<16x96xf32> to vector<16x8xf32>
    %cst_19 = arith.constant dense<0.000000e+00> : vector<16x16xf32>
    %39 = tpu.matmul %36, %37, %cst_19 {dimension_numbers = #tpu.dot_dimension_numbers<[1], [1], [0], [0], [0, 0, 1, 0], [], []>} : vector<16x8xf32>, vector<16x8xf32>, vector<16x16xf32> -> vector<16x16xf32>
    %cst_20 = arith.constant 0.353553385 : f32
    %40 = vector.broadcast %cst_20 : f32 to vector<16x16xf32>
    %41 = arith.mulf %39, %40 : vector<16x16xf32>
    %42 = arith.addf %41, %35 : vector<16x16xf32>
    %43 = math.exp %42 : vector<16x16xf32>
    %cst_21 = arith.constant dense<0.000000e+00> : vector<16xf32>
    %44 = vector.multi_reduction <add>, %43, %cst_21 [1] : vector<16x16xf32> to vector<16xf32>
    %45 = vector.shape_cast %44 : vector<16xf32> to vector<16x1xf32>
    %cst_22 = arith.constant dense<0.000000e+00> : vector<16x8xf32>
    %46 = tpu.matmul %43, %38, %cst_22 {dimension_numbers = #tpu.dot_dimension_numbers<[1], [0], [0], [1], [0, 0, 1, 1], [], []>} : vector<16x16xf32>, vector<16x8xf32>, vector<16x8xf32> -> vector<16x8xf32>
    %47 = vector.broadcast %45 : vector<16x1xf32> to vector<16x8xf32>
    %48 = arith.divf %46, %47 : vector<16x8xf32>
    %c0_23 = arith.constant 0 : index
    %c0_24 = arith.constant 0 : index
    %49 = vector.load %arg8[%c0_23, %c0_24] : memref<16x32xf32, #tpu.memory_space<vmem>>, vector<16x8xf32>
    tpu.vector_store %arg8[%c0_23, %c0_24], %48 {strides = array<i32>} : memref<16x32xf32, #tpu.memory_space<vmem>>, vector<16x8xf32>,
    %50 = vector.extract_strided_slice %34 {offsets = [0, 8], sizes = [16, 8], strides = [1, 1]} : vector<16x96xf32> to vector<16x8xf32>
    %51 = vector.extract_strided_slice %34 {offsets = [0, 40], sizes = [16, 8], strides = [1, 1]} : vector<16x96xf32> to vector<16x8xf32>
    %52 = vector.extract_strided_slice %34 {offsets = [0, 72], sizes = [16, 8], strides = [1, 1]} : vector<16x96xf32> to vector<16x8xf32>
    %cst_25 = arith.constant dense<0.000000e+00> : vector<16x16xf32>
    %53 = tpu.matmul %50, %51, %cst_25 {dimension_numbers = #tpu.dot_dimension_numbers<[1], [1], [0], [0], [0, 0, 1, 0], [], []>} : vector<16x8xf32>, vector<16x8xf32>, vector<16x16xf32> -> vector<16x16xf32>
    %cst_26 = arith.constant 0.353553385 : f32
    %54 = vector.broadcast %cst_26 : f32 to vector<16x16xf32>
    %55 = arith.mulf %53, %54 : vector<16x16xf32>
    %56 = arith.addf %55, %35 : vector<16x16xf32>
    %57 = math.exp %56 : vector<16x16xf32>
    %cst_27 = arith.constant dense<0.000000e+00> : vector<16xf32>
    %58 = vector.multi_reduction <add>, %57, %cst_27 [1] : vector<16x16xf32> to vector<16xf32>
    %59 = vector.shape_cast %58 : vector<16xf32> to vector<16x1xf32>
    %cst_28 = arith.constant dense<0.000000e+00> : vector<16x8xf32>
    %60 = tpu.matmul %57, %52, %cst_28 {dimension_numbers = #tpu.dot_dimension_numbers<[1], [0], [0], [1], [0, 0, 1, 1], [], []>} : vector<16x16xf32>, vector<16x8xf32>, vector<16x8xf32> -> vector<16x8xf32>
    %61 = vector.broadcast %59 : vector<16x1xf32> to vector<16x8xf32>
    %62 = arith.divf %60, %61 : vector<16x8xf32>
    %c0_29 = arith.constant 0 : index
    %c8 = arith.constant 8 : index
    %63 = vector.load %arg8[%c0_29, %c8] : memref<16x32xf32, #tpu.memory_space<vmem>>, vector<16x8xf32>
    tpu.vector_store %arg8[%c0_29, %c8], %62 {strides = array<i32>} : memref<16x32xf32, #tpu.memory_space<vmem>>, vector<16x8xf32>,
    %64 = vector.extract_strided_slice %34 {offsets = [0, 16], sizes = [16, 8], strides = [1, 1]} : vector<16x96xf32> to vector<16x8xf32>
    %65 = vector.extract_strided_slice %34 {offsets = [0, 48], sizes = [16, 8], strides = [1, 1]} : vector<16x96xf32> to vector<16x8xf32>
    %66 = vector.extract_strided_slice %34 {offsets = [0, 80], sizes = [16, 8], strides = [1, 1]} : vector<16x96xf32> to vector<16x8xf32>
    %cst_30 = arith.constant dense<0.000000e+00> : vector<16x16xf32>
    %67 = tpu.matmul %64, %65, %cst_30 {dimension_numbers = #tpu.dot_dimension_numbers<[1], [1], [0], [0], [0, 0, 1, 0], [], []>} : vector<16x8xf32>, vector<16x8xf32>, vector<16x16xf32> -> vector<16x16xf32>
    %cst_31 = arith.constant 0.353553385 : f32
    %68 = vector.broadcast %cst_31 : f32 to vector<16x16xf32>
    %69 = arith.mulf %67, %68 : vector<16x16xf32>
    %70 = arith.addf %69, %35 : vector<16x16xf32>
    %71 = math.exp %70 : vector<16x16xf32>
    %cst_32 = arith.constant dense<0.000000e+00> : vector<16xf32>
    %72 = vector.multi_reduction <add>, %71, %cst_32 [1] : vector<16x16xf32> to vector<16xf32>
    %73 = vector.shape_cast %72 : vector<16xf32> to vector<16x1xf32>
    %cst_33 = arith.constant dense<0.000000e+00> : vector<16x8xf32>
    %74 = tpu.matmul %71, %66, %cst_33 {dimension_numbers = #tpu.dot_dimension_numbers<[1], [0], [0], [1], [0, 0, 1, 1], [], []>} : vector<16x16xf32>, vector<16x8xf32>, vector<16x8xf32> -> vector<16x8xf32>
    %75 = vector.broadcast %73 : vector<16x1xf32> to vector<16x8xf32>
    %76 = arith.divf %74, %75 : vector<16x8xf32>
    %c0_34 = arith.constant 0 : index
    %c16 = arith.constant 16 : index
    %77 = vector.load %arg8[%c0_34, %c16] : memref<16x32xf32, #tpu.memory_space<vmem>>, vector<16x8xf32>
    tpu.vector_store %arg8[%c0_34, %c16], %76 {strides = array<i32>} : memref<16x32xf32, #tpu.memory_space<vmem>>, vector<16x8xf32>,
    %78 = vector.extract_strided_slice %34 {offsets = [0, 24], sizes = [16, 8], strides = [1, 1]} : vector<16x96xf32> to vector<16x8xf32>
    %79 = vector.extract_strided_slice %34 {offsets = [0, 56], sizes = [16, 8], strides = [1, 1]} : vector<16x96xf32> to vector<16x8xf32>
    %80 = vector.extract_strided_slice %34 {offsets = [0, 88], sizes = [16, 8], strides = [1, 1]} : vector<16x96xf32> to vector<16x8xf32>
    %cst_35 = arith.constant dense<0.000000e+00> : vector<16x16xf32>
    %81 = tpu.matmul %78, %79, %cst_35 {dimension_numbers = #tpu.dot_dimension_numbers<[1], [1], [0], [0], [0, 0, 1, 0], [], []>} : vector<16x8xf32>, vector<16x8xf32>, vector<16x16xf32> -> vector<16x16xf32>
    %cst_36 = arith.constant 0.353553385 : f32
    %82 = vector.broadcast %cst_36 : f32 to vector<16x16xf32>
    %83 = arith.mulf %81, %82 : vector<16x16xf32>
    %84 = arith.addf %83, %35 : vector<16x16xf32>
    %85 = math.exp %84 : vector<16x16xf32>
    %cst_37 = arith.constant dense<0.000000e+00> : vector<16xf32>
    %86 = vector.multi_reduction <add>, %85, %cst_37 [1] : vector<16x16xf32> to vector<16xf32>
    %87 = vector.shape_cast %86 : vector<16xf32> to vector<16x1xf32>
    %cst_38 = arith.constant dense<0.000000e+00> : vector<16x8xf32>
    %88 = tpu.matmul %85, %80, %cst_38 {dimension_numbers = #tpu.dot_dimension_numbers<[1], [0], [0], [1], [0, 0, 1, 1], [], []>} : vector<16x16xf32>, vector<16x8xf32>, vector<16x8xf32> -> vector<16x8xf32>
    %89 = vector.broadcast %87 : vector<16x1xf32> to vector<16x8xf32>
    %90 = arith.divf %88, %89 : vector<16x8xf32>
    %c0_39 = arith.constant 0 : index
    %c24 = arith.constant 24 : index
    %91 = vector.load %arg8[%c0_39, %c24] : memref<16x32xf32, #tpu.memory_space<vmem>>, vector<16x8xf32>
    tpu.vector_store %arg8[%c0_39, %c24], %90 {strides = array<i32>} : memref<16x32xf32, #tpu.memory_space<vmem>>, vector<16x8xf32>,
    %c0_40 = arith.constant 0 : index
    %c0_41 = arith.constant 0 : index
    %92 = vector.load %arg8[%c0_40, %c0_41] : memref<16x32xf32, #tpu.memory_space<vmem>>, vector<16x32xf32>
    %c0_42 = arith.constant 0 : index
    %c0_43 = arith.constant 0 : index
    %93 = vector.load %arg4[%c0_42, %c0_43] : memref<32x32xf32, #tpu.memory_space<vmem>>, vector<32x32xf32>
    %cst_44 = arith.constant dense<0.000000e+00> : vector<16x32xf32>
    %94 = tpu.matmul %92, %93, %cst_44 {dimension_numbers = #tpu.dot_dimension_numbers<[1], [0], [0], [1], [0, 0, 1, 1], [], []>} : vector<16x32xf32>, vector<32x32xf32>, vector<16x32xf32> -> vector<16x32xf32>
    %95 = vector.broadcast %5 : vector<1x32xf32> to vector<16x32xf32>
    %96 = arith.addf %94, %95 : vector<16x32xf32>
    %97 = arith.addf %0, %96 : vector<16x32xf32>
    %cst_45 = arith.constant dense<0.000000e+00> : vector<16xf32>
    %98 = vector.multi_reduction <add>, %97, %cst_45 [1] : vector<16x32xf32> to vector<16xf32>
    %99 = vector.shape_cast %98 : vector<16xf32> to vector<16x1xf32>
    %cst_46 = arith.constant 3.200000e+01 : f32
    %100 = vector.broadcast %cst_46 : f32 to vector<16x1xf32>
    %101 = arith.divf %99, %100 : vector<16x1xf32>
    %102 = vector.broadcast %101 : vector<16x1xf32> to vector<16x32xf32>
    %103 = arith.subf %97, %102 : vector<16x32xf32>
    %104 = arith.mulf %103, %103 : vector<16x32xf32>
    %cst_47 = arith.constant dense<0.000000e+00> : vector<16xf32>
    %105 = vector.multi_reduction <add>, %104, %cst_47 [1] : vector<16x32xf32> to vector<16xf32>
    %106 = vector.shape_cast %105 : vector<16xf32> to vector<16x1xf32>
    %cst_48 = arith.constant 3.200000e+01 : f32
    %107 = vector.broadcast %cst_48 : f32 to vector<16x1xf32>
    %108 = arith.divf %106, %107 : vector<16x1xf32>
    %109 = vector.broadcast %101 : vector<16x1xf32> to vector<16x32xf32>
    %110 = arith.subf %97, %109 : vector<16x32xf32>
    %cst_49 = arith.constant 9.99999974E-6 : f32
    %111 = vector.broadcast %cst_49 : f32 to vector<16x1xf32>
    %112 = arith.addf %108, %111 : vector<16x1xf32>
    %113 = math.rsqrt %112 : vector<16x1xf32>
    %114 = vector.broadcast %113 : vector<16x1xf32> to vector<16x32xf32>
    %115 = arith.mulf %110, %114 : vector<16x32xf32>
    %116 = vector.broadcast %3 : vector<1x32xf32> to vector<16x32xf32>
    %117 = arith.mulf %115, %116 : vector<16x32xf32>
    %118 = vector.broadcast %4 : vector<1x32xf32> to vector<16x32xf32>
    %119 = arith.addf %117, %118 : vector<16x32xf32>
    %c0_50 = arith.constant 0 : index
    %c0_51 = arith.constant 0 : index
    %120 = vector.load %arg5[%c0_50, %c0_51] : memref<32x128xf32, #tpu.memory_space<vmem>>, vector<32x128xf32>
    %cst_52 = arith.constant dense<0.000000e+00> : vector<16x128xf32>
    %121 = tpu.matmul %119, %120, %cst_52 {dimension_numbers = #tpu.dot_dimension_numbers<[1], [0], [0], [1], [0, 0, 1, 1], [], []>} : vector<16x32xf32>, vector<32x128xf32>, vector<16x128xf32> -> vector<16x128xf32>
    %122 = vector.broadcast %7 : vector<1x128xf32> to vector<16x128xf32>
    %123 = arith.addf %121, %122 : vector<16x128xf32>
    %cst_53 = arith.constant 5.000000e-01 : f32
    %124 = vector.broadcast %cst_53 : f32 to vector<16x128xf32>
    %125 = arith.mulf %124, %123 : vector<16x128xf32>
    %cst_54 = arith.constant 4.471500e-02 : f32
    %126 = vector.broadcast %cst_54 : f32 to vector<16x128xf32>
    %127 = arith.mulf %126, %123 : vector<16x128xf32>
    %128 = arith.mulf %127, %123 : vector<16x128xf32>
    %129 = arith.mulf %128, %123 : vector<16x128xf32>
    %130 = arith.addf %123, %129 : vector<16x128xf32>
    %cst_55 = arith.constant 0.797884583 : f32
    %131 = vector.broadcast %cst_55 : f32 to vector<16x128xf32>
    %132 = arith.mulf %131, %130 : vector<16x128xf32>
    %133 = math.tanh %132 : vector<16x128xf32>
    %cst_56 = arith.constant 1.000000e+00 : f32
    %134 = vector.broadcast %cst_56 : f32 to vector<16x128xf32>
    %135 = arith.addf %134, %133 : vector<16x128xf32>
    %136 = arith.mulf %125, %135 : vector<16x128xf32>
    %c0_57 = arith.constant 0 : index
    %c0_58 = arith.constant 0 : index
    %137 = vector.load %arg6[%c0_57, %c0_58] : memref<128x32xf32, #tpu.memory_space<vmem>>, vector<128x32xf32>
    %cst_59 = arith.constant dense<0.000000e+00> : vector<16x32xf32>
    %138 = tpu.matmul %136, %137, %cst_59 {dimension_numbers = #tpu.dot_dimension_numbers<[1], [0], [0], [1], [0, 0, 1, 1], [], []>} : vector<16x128xf32>, vector<128x32xf32>, vector<16x32xf32> -> vector<16x32xf32>
    %139 = vector.broadcast %6 : vector<1x32xf32> to vector<16x32xf32>
    %140 = arith.addf %138, %139 : vector<16x32xf32>
    %141 = arith.addf %97, %140 : vector<16x32xf32>
    %c0_60 = arith.constant 0 : index
    %c0_61 = arith.constant 0 : index
    %142 = vector.load %arg7[%c0_60, %c0_61] : memref<16x32xf32, #tpu.memory_space<vmem>>, vector<16x32xf32>
    tpu.vector_store %arg7[%c0_60, %c0_61], %141 {strides = array<i32>} : memref<16x32xf32, #tpu.memory_space<vmem>>, vector<16x32xf32>,
    return
  }
}

</mosaic_0001>

<llo_original>
// kernel: tpu_custom_call.1
$region0: #{tpu_custom_call.1}
  #allocation0 [shape = 'u32[]', space=smem, size = 0x4, offset = 0x4, fixed_abs, tag = 'smem constant byte address 0x4 - core index']
  #allocation1 [shape = 'u32[144,128]{1,0:T(1,128)}', space=vmem, size = 0x12000, scoped, tag = 'internal scratch']
  #allocation2 [shape = 'f32[16,32]{1,0:T(8,128)}', space=vmem, size = 0x2000, scoped, tag = 'scratch operand']
  %s0 = inlined_call_operand.vmem [shape: f32[16,32], index: 0, kind: input, shape index: {}]
  %s1 = inlined_call_operand.vmem [shape: f32[16,16], index: 1, kind: input, shape index: {}]
  %s2 = inlined_call_operand.vmem [shape: f32[8,128], index: 2, kind: input, shape index: {}]
  %s3 = inlined_call_operand.vmem [shape: f32[32,96], index: 3, kind: input, shape index: {}]
  %s4 = inlined_call_operand.vmem [shape: f32[32,32], index: 4, kind: input, shape index: {}]
  %s5 = inlined_call_operand.vmem [shape: f32[32,128], index: 5, kind: input, shape index: {}]
  %s6 = inlined_call_operand.vmem [shape: f32[128,32], index: 6, kind: input, shape index: {}]
  %s7 = inlined_call_operand.hbm [shape: f32[16,32], index: 7, kind: output, shape index: {}]
  %s8 = sld [smem:[#allocation0]]
  $region38: #{tpu_custom_call.1} parent=0
    _
  %s10 = ssub.s32 1, %s8
  %s11 = scalar_select 0, %s10, %s8
  $region1: #{tpu_custom_call.1} parent=0
    #allocation3 [shape = 'u8[8192]{0}', space=vmem, size = 0x2000, scoped, tag = 'output window, operand 0, single buffered']
    #allocation4 [shape = 's32[1]{0}', space=sflag, size = 0x4, scoped, tag = 'scoped memory for tpu_custom_call.1']
    %12 = vsyncpa [#allocation4], 0
    // Predicated region
    $region2: #{tpu_custom_call.1} parent=1 // pred_check
      _
    $region3: #{tpu_custom_call.1} parent=1 // pred_check_branch
      %14 = sbr.rel (0) target = $region5
    $region4: #{tpu_custom_call.1} parent=1 // pred_region
      _
    $region5: #{tpu_custom_call.1} parent=1 // pred_fallthru
      _
    // Predicated region
    $region6: #{tpu_custom_call.1} parent=1 // pred_check
      _
    $region7: #{tpu_custom_call.1} parent=1 // pred_check_branch
      %16 = sbr.rel (0) target = $region9
    $region8: #{tpu_custom_call.1} parent=1 // pred_region
      _
    $region9: #{tpu_custom_call.1} parent=1 // pred_fallthru
      _
    // Predicated region
    $region10: #{tpu_custom_call.1} parent=1 // pred_check
      _
    $region11: #{tpu_custom_call.1} parent=1 // pred_check_branch
      %18 = sbr.rel (0) target = $region13
    $region12: #{tpu_custom_call.1} parent=1 // pred_region
      _
    $region13: #{tpu_custom_call.1} parent=1 // pred_fallthru
      _
    // Predicated region
    $region14: #{tpu_custom_call.1} parent=1 // pred_check
      _
    $region15: #{tpu_custom_call.1} parent=1 // pred_check_branch
      %20 = sbr.rel (0) target = $region17
    $region16: #{tpu_custom_call.1} parent=1 // pred_region
      _
    $region17: #{tpu_custom_call.1} parent=1 // pred_fallthru
      _
    // Predicated region
    $region18: #{tpu_custom_call.1} parent=1 // pred_check
      _
    $region19: #{tpu_custom_call.1} parent=1 // pred_check_branch
      %22 = sbr.rel (0) target = $region21
    $region20: #{tpu_custom_call.1} parent=1 // pred_region
      _
    $region21: #{tpu_custom_call.1} parent=1 // pred_fallthru
      _
    // Predicated region
    $region22: #{tpu_custom_call.1} parent=1 // pred_check
      _
    $region23: #{tpu_custom_call.1} parent=1 // pred_check_branch
      %24 = sbr.rel (0) target = $region25
    $region24: #{tpu_custom_call.1} parent=1 // pred_region
      _
    $region25: #{tpu_custom_call.1} parent=1 // pred_fallthru
      _
    // Predicated region
    $region26: #{tpu_custom_call.1} parent=1 // pred_check
      _
    $region27: #{tpu_custom_call.1} parent=1 // pred_check_branch
      %26 = sbr.rel (0) target = $region29
    $region28: #{tpu_custom_call.1} parent=1 // pred_region
      _
    $region29: #{tpu_custom_call.1} parent=1 // pred_fallthru
      _
    %v27 = vld [vmem:[%s0] sm:$0xff]
    %v28 = vld [vmem:[%s0 + $0x8] sm:$0xff]
    %v29 = vld [vmem:[%s2] sm:$0x1]
    %v30 = vld [vmem:[%s2 + $0x1] sm:$0x1]
    %v31 = vld [vmem:[%s2 + $0x2] sm:$0x1]
    %v32 = vld [vmem:[%s2 + $0x3] sm:$0x1]
    %v33 = vld [vmem:[%s2 + $0x4] sm:$0x1]
    %v34 = vld [vmem:[%s2 + $0x5] sm:$0x1]
    %v35 = vld [vmem:[%s2 + $0x6] sm:$0x1]
    %v36 = vld [vmem:[%s2 + $0x7] sm:$0x1]
    %vm37 = vcmask 261120
    %v38 = vsel %vm37, %v27, 0.0
    %39 = vadd.xlane.f32.xlu0 %v38
    %v40 = vpop.xlane.xlu0 %39
    %v41 = vsel %vm37, %v28, 0.0
    %42 = vadd.xlane.f32.xlu0 %v41
    %v43 = vpop.xlane.xlu0 %42
    %v44 = vrcp.pop 32.0
    %v45 = vmul.f32 %v40, %v44
    %v46 = vmul.f32 %v43, %v44
    %v47 = vsub.f32 %v27, %v45
    %v48 = vsub.f32 %v28, %v46
    %v49 = vmul.f32 %v47, %v47
    %v50 = vmul.f32 %v48, %v48
    %v51 = vsel %vm37, %v49, 0.0
    %52 = vadd.xlane.f32.xlu0 %v51
    %v53 = vpop.xlane.xlu0 %52
    %v54 = vsel %vm37, %v50, 0.0
    %55 = vadd.xlane.f32.xlu0 %v54
    %v56 = vpop.xlane.xlu0 %55
    %v57 = vmul.f32 %v53, %v44
    %v58 = vmul.f32 %v56, %v44
    %v59 = vadd.f32 %v57, 1e-05
    %v60 = vadd.f32 %v58, 1e-05
    %v61 = vrsqrt.pop %v59
    %v62 = vrsqrt.pop %v60
    %v63 = vmul.f32 %v47, %v61
    %v64 = vmul.f32 %v48, %v62
    %v65 = vlaneseq
    %v66 = vshrl.u32 %v65, 7
    %v67 = vsub.s32 0, %v66
    %v68 = vrot.slane %v29, %v67
    %v69 = vmul.f32 %v63, %v68
    %v70 = vmul.f32 %v64, %v68
    %v71 = vlaneseq
    %v72 = vshrl.u32 %v71, 7
    %v73 = vsub.s32 0, %v72
    %v74 = vrot.slane %v30, %v73
    %v75 = vadd.f32 %v69, %v74
    %v76 = vadd.f32 %v70, %v74
    %v77 = vld [vmem:[%s3] sm:$0xff]
    %v78 = vld [vmem:[%s3 + $0x8] sm:$0xff]
    %v79 = vld [vmem:[%s3 + $0x10] sm:$0xff]
    %v80 = vld [vmem:[%s3 + $0x18] sm:$0xff]
    %v81 = vlaneseq
    %v82 = vshrl.u32 %v81, 7
    %v83 = vsub.s32 0, %v82
    %v84 = vrot.slane %v36, %v83
    %v86 = vsel %vm37, %v75, 0
    %v89 = vsel %vm37, %v76, 0
    %91 = vmatprep.subr.mxu0 0.0
    %92 = vmatpush1.msra.mxu0 %v77
    %93 = vmatprep.subr.mxu0 0.0
    %94 = vmatpush1.msra.mxu0 %v78
    %95 = vmatprep.subr.mxu0 0.0
    %96 = vmatpush1.msra.mxu0 %v79
    %97 = vmatprep.subr.mxu0 0.0
    %98 = vmatpush1.msra.mxu0 %v80
    %99 = vmatprep.subr.mxu0 0.0
    %100 = vmatpush1.msra.mxu0 0.0
    %101 = vmatprep.subr.mxu0 0.0
    %102 = vmatpush1.msra.mxu0 0.0
    %103 = vmatprep.subr.mxu0 0.0
    %104 = vmatpush1.msra.mxu0 0.0
    %105 = vmatprep.subr.mxu0 0.0
    %106 = vmatpush1.msra.mxu0 0.0
    %107 = vmatprep.subr.mxu0 0.0
    %108 = vmatpush1.msra.mxu0 0.0
    %109 = vmatprep.subr.mxu0 0.0
    %110 = vmatpush1.msra.mxu0 0.0
    %111 = vmatprep.subr.mxu0 0.0
    %112 = vmatpush1.msra.mxu0 0.0
    %113 = vmatprep.subr.mxu0 0.0
    %114 = vmatpush1.msra.mxu0 0.0
    %115 = vmatprep.subr.mxu0 0.0
    %116 = vmatpush1.msra.mxu0 0.0
    %117 = vmatprep.subr.mxu0 0.0
    %118 = vmatpush1.msra.mxu0 0.0
    %119 = vmatprep.subr.mxu0 0.0
    %120 = vmatpush1.msra.mxu0 0.0
    %121 = vmatprep.subr.mxu0 0.0
    %122 = vmatpush1.msra.mxu0 0.0
    %123 = vmatprep.subr.mxu0 0.0
    %124 = vmatpush1.msra.mxu0 0.0
    %125 = vmatprep.subr.mxu0 0.0
    %126 = vmatpush1.msra.mxu0 0.0
    %127 = vmatprep.subr.mxu0 0.0
    %128 = vmatpush1.msra.mxu0 0.0
    %129 = vmatprep.subr.mxu0 0.0
    %130 = vmatpush1.msra.mxu0 0.0
    %131 = vmatprep.subr.mxu0 0.0
    %132 = vmatpush1.msra.mxu0 0.0
    %133 = vmatprep.subr.mxu0 0.0
    %134 = vmatpush1.msra.mxu0 0.0
    %135 = vmatprep.subr.mxu0 0.0
    %136 = vmatpush1.msra.mxu0 0.0
    %137 = vmatprep.subr.mxu0 0.0
    %138 = vmatpush1.msra.mxu0 0.0
    %139 = vmatprep.subr.mxu0 0.0
    %140 = vmatpush1.msra.mxu0 0.0
    %141 = vmatprep.subr.mxu0 0.0
    %142 = vmatpush1.msra.mxu0 0.0
    %143 = vmatprep.subr.mxu0 0.0
    %144 = vmatpush1.msra.mxu0 0.0
    %145 = vmatprep.subr.mxu0 0.0
    %146 = vmatpush1.msra.mxu0 0.0
    %147 = vmatprep.subr.mxu0 0.0
    %148 = vmatpush1.msra.mxu0 0.0
    %149 = vmatprep.subr.mxu0 0.0
    %150 = vmatpush1.msra.mxu0 0.0
    %151 = vmatprep.subr.mxu0 0.0
    %152 = vmatpush1.msra.mxu0 0.0
    %153 = vmatprep.subr.mxu0 0.0
    %154 = vmatpush1.msra.mxu0 0.0
    %155 = vmatprep.mubr.f32.mxu0 0.0
    %156 = vmatmul.mubr.f32.gmra.mrb[0].mxu0 %v86
    %v157 = vpop.f32.mrb[0].mxu0
    %v158 = vadd.f32 %v84, %v157
    %v159 = vpop.f32.mrb[0].mxu0
    %160 = vmatprep.mubr.f32.mxu0 0.0
    %161 = vmatmul.mubr.f32.gmra.mrb[0].mxu0 %v89
    %v162 = vpop.f32.mrb[0].mxu0
    %v163 = vadd.f32 %v84, %v162
    %v164 = vpop.f32.mrb[0].mxu0
    %165 = vdwg.mxu0
    %v166 = vld [vmem:[%s1] sm:$0xff]
    %v167 = vld [vmem:[%s1 + $0x8] sm:$0xff]
    %170 = vrot.lane.b32.xlu0 %v158, 96
    %v171 = vpop.permute.xlu0 %170
    %172 = vrot.lane.b32.xlu0 %v163, 96
    %v173 = vpop.permute.xlu0 %172
    %vm174 = vcmask 64512
    %v175 = vsel %vm174, %v158, 0
    %v177 = vsel %vm174, %v163, 0
    %v179 = vsel %vm174, %v171, 0
    %v181 = vsel %vm174, %v173, 0
    %183 = vmatprep.subr.mxu0 0.0
    %184 = vmatpush1.xpose.msra.mxu0 %v179
    %185 = vmatprep.subr.mxu0 0.0
    %186 = vmatpush1.xpose.msra.mxu0 %v181
    %187 = vmatprep.subr.mxu0 0.0
    %188 = vmatpush1.xpose.msra.mxu0 0.0
    %189 = vmatprep.subr.mxu0 0.0
    %190 = vmatpush1.xpose.msra.mxu0 0.0
    %191 = vmatprep.subr.mxu0 0.0
    %192 = vmatpush1.xpose.msra.mxu0 0.0
    %193 = vmatprep.subr.mxu0 0.0
    %194 = vmatpush1.xpose.msra.mxu0 0.0
    %195 = vmatprep.subr.mxu0 0.0
    %196 = vmatpush1.xpose.msra.mxu0 0.0
    %197 = vmatprep.subr.mxu0 0.0
    %198 = vmatpush1.xpose.msra.mxu0 0.0
    %199 = vmatprep.subr.mxu0 0.0
    %200 = vmatpush1.xpose.msra.mxu0 0.0
    %201 = vmatprep.subr.mxu0 0.0
    %202 = vmatpush1.xpose.msra.mxu0 0.0
    %203 = vmatprep.subr.mxu0 0.0
    %204 = vmatpush1.xpose.msra.mxu0 0.0
    %205 = vmatprep.subr.mxu0 0.0
    %206 = vmatpush1.xpose.msra.mxu0 0.0
    %207 = vmatprep.subr.mxu0 0.0
    %208 = vmatpush1.xpose.msra.mxu0 0.0
    %209 = vmatprep.subr.mxu0 0.0
    %210 = vmatpush1.xpose.msra.mxu0 0.0
    %211 = vmatprep.subr.mxu0 0.0
    %212 = vmatpush1.xpose.msra.mxu0 0.0
    %213 = vmatprep.subr.mxu0 0.0
    %214 = vmatpush1.xpose.msra.mxu0 0.0
    %215 = vmatprep.subr.mxu0 0.0
    %216 = vmatpush1.xpose.msra.mxu0 0.0
    %217 = vmatprep.subr.mxu0 0.0
    %218 = vmatpush1.xpose.msra.mxu0 0.0
    %219 = vmatprep.subr.mxu0 0.0
    %220 = vmatpush1.xpose.msra.mxu0 0.0
    %221 = vmatprep.subr.mxu0 0.0
    %222 = vmatpush1.xpose.msra.mxu0 0.0
    %223 = vmatprep.subr.mxu0 0.0
    %224 = vmatpush1.xpose.msra.mxu0 0.0
    %225 = vmatprep.subr.mxu0 0.0
    %226 = vmatpush1.xpose.msra.mxu0 0.0
    %227 = vmatprep.subr.mxu0 0.0
    %228 = vmatpush1.xpose.msra.mxu0 0.0
    %229 = vmatprep.subr.mxu0 0.0
    %230 = vmatpush1.xpose.msra.mxu0 0.0
    %231 = vmatprep.subr.mxu0 0.0
    %232 = vmatpush1.xpose.msra.mxu0 0.0
    %233 = vmatprep.subr.mxu0 0.0
    %234 = vmatpush1.xpose.msra.mxu0 0.0
    %235 = vmatprep.subr.mxu0 0.0
    %236 = vmatpush1.xpose.msra.mxu0 0.0
    %237 = vmatprep.subr.mxu0 0.0
    %238 = vmatpush1.xpose.msra.mxu0 0.0
    %239 = vmatprep.subr.mxu0 0.0
    %240 = vmatpush1.xpose.msra.mxu0 0.0
    %241 = vmatprep.subr.mxu0 0.0
    %242 = vmatpush1.xpose.msra.mxu0 0.0
    %243 = vmatprep.subr.mxu0 0.0
    %244 = vmatpush1.xpose.msra.mxu0 0.0
    %245 = vmatprep.subr.mxu0 0.0
    %246 = vmatpush1.xpose.msra.mxu0 0.0
    %247 = vmatprep.mubr.f32.mxu0 0.0
    %248 = vmatmul.mubr.f32.gmra.mrb[0].mxu0 %v175
    %v249 = vpop.f32.mrb[0].mxu0
    %v250 = vadd.f32 0.0, %v249
    %v251 = vpop.f32.mrb[0].mxu0
    %252 = vmatprep.mubr.f32.mxu0 0.0
    %253 = vmatmul.mubr.f32.gmra.mrb[0].mxu0 %v177
    %v254 = vpop.f32.mrb[0].mxu0
    %v255 = vadd.f32 0.0, %v254
    %v256 = vpop.f32.mrb[0].mxu0
    %257 = vdwg.mxu0
    %v258 = vmul.f32 %v250, 0.35355338
    %v259 = vmul.f32 %v255, 0.35355338
    %v260 = vadd.f32 %v258, %v166
    %v261 = vadd.f32 %v259, %v167
    %v262 = vmul.f32 %v260, 1.442695
    %v263 = vpow.pop %v262
    %v264 = vmul.f32 %v261, 1.442695
    %v265 = vpow.pop %v264
    %vm266 = vcmask 130048
    %v267 = vsel %vm266, %v263, 0.0
    %268 = vadd.xlane.f32.xlu0 %v267
    %v269 = vpop.xlane.xlu0 %268
    %v270 = vsel %vm266, %v265, 0.0
    %271 = vadd.xlane.f32.xlu0 %v270
    %v272 = vpop.xlane.xlu0 %271
    %273 = vrot.lane.b32.xlu0 %v158, 64
    %v274 = vpop.permute.xlu0 %273
    %275 = vrot.lane.b32.xlu0 %v163, 64
    %v276 = vpop.permute.xlu0 %275
    %v280 = vsel %vm266, %v263, 0
    %v283 = vsel %vm266, %v265, 0
    %285 = vmatprep.subr.mxu0 0.0
    %286 = vmatpush1.msra.mxu0 %v274
    %287 = vmatprep.subr.mxu0 0.0
    %288 = vmatpush1.msra.mxu0 %v276
    %289 = vmatprep.subr.mxu0 0.0
    %290 = vmatpush1.msra.mxu0 0.0
    %291 = vmatprep.subr.mxu0 0.0
    %292 = vmatpush1.msra.mxu0 0.0
    %293 = vmatprep.subr.mxu0 0.0
    %294 = vmatpush1.msra.mxu0 0.0
    %295 = vmatprep.subr.mxu0 0.0
    %296 = vmatpush1.msra.mxu0 0.0
    %297 = vmatprep.subr.mxu0 0.0
    %298 = vmatpush1.msra.mxu0 0.0
    %299 = vmatprep.subr.mxu0 0.0
    %300 = vmatpush1.msra.mxu0 0.0
    %301 = vmatprep.subr.mxu0 0.0
    %302 = vmatpush1.msra.mxu0 0.0
    %303 = vmatprep.subr.mxu0 0.0
    %304 = vmatpush1.msra.mxu0 0.0
    %305 = vmatprep.subr.mxu0 0.0
    %306 = vmatpush1.msra.mxu0 0.0
    %307 = vmatprep.subr.mxu0 0.0
    %308 = vmatpush1.msra.mxu0 0.0
    %309 = vmatprep.subr.mxu0 0.0
    %310 = vmatpush1.msra.mxu0 0.0
    %311 = vmatprep.subr.mxu0 0.0
    %312 = vmatpush1.msra.mxu0 0.0
    %313 = vmatprep.subr.mxu0 0.0
    %314 = vmatpush1.msra.mxu0 0.0
    %315 = vmatprep.subr.mxu0 0.0
    %316 = vmatpush1.msra.mxu0 0.0
    %317 = vmatprep.subr.mxu0 0.0
    %318 = vmatpush1.msra.mxu0 0.0
    %319 = vmatprep.subr.mxu0 0.0
    %320 = vmatpush1.msra.mxu0 0.0
    %321 = vmatprep.subr.mxu0 0.0
    %322 = vmatpush1.msra.mxu0 0.0
    %323 = vmatprep.subr.mxu0 0.0
    %324 = vmatpush1.msra.mxu0 0.0
    %325 = vmatprep.subr.mxu0 0.0
    %326 = vmatpush1.msra.mxu0 0.0
    %327 = vmatprep.subr.mxu0 0.0
    %328 = vmatpush1.msra.mxu0 0.0
    %329 = vmatprep.subr.mxu0 0.0
    %330 = vmatpush1.msra.mxu0 0.0
    %331 = vmatprep.subr.mxu0 0.0
    %332 = vmatpush1.msra.mxu0 0.0
    %333 = vmatprep.subr.mxu0 0.0
    %334 = vmatpush1.msra.mxu0 0.0
    %335 = vmatprep.subr.mxu0 0.0
    %336 = vmatpush1.msra.mxu0 0.0
    %337 = vmatprep.subr.mxu0 0.0
    %338 = vmatpush1.msra.mxu0 0.0
    %339 = vmatprep.subr.mxu0 0.0
    %340 = vmatpush1.msra.mxu0 0.0
    %341 = vmatprep.subr.mxu0 0.0
    %342 = vmatpush1.msra.mxu0 0.0
    %343 = vmatprep.subr.mxu0 0.0
    %344 = vmatpush1.msra.mxu0 0.0
    %345 = vmatprep.subr.mxu0 0.0
    %346 = vmatpush1.msra.mxu0 0.0
    %347 = vmatprep.subr.mxu0 0.0
    %348 = vmatpush1.msra.mxu0 0.0
    %349 = vmatprep.mubr.f32.mxu0 0.0
    %350 = vmatmul.mubr.f32.gmra.mrb[0].mxu0 %v280
    %v351 = vpop.f32.mrb[0].mxu0
    %v352 = vadd.f32 0.0, %v351
    %v353 = vpop.f32.mrb[0].mxu0
    %354 = vmatprep.mubr.f32.mxu0 0.0
    %355 = vmatmul.mubr.f32.gmra.mrb[0].mxu0 %v283
    %v356 = vpop.f32.mrb[0].mxu0
    %v357 = vadd.f32 0.0, %v356
    %v358 = vpop.f32.mrb[0].mxu0
    %359 = vdwg.mxu0
    %v360 = vrcp.pop %v269
    %v361 = vmul.f32 %v352, %v360
    %v362 = vrcp.pop %v272
    %v363 = vmul.f32 %v357, %v362
    %364 = vst.msk [vmem:[#allocation2] sm:$0xff] %vm174, %v361
    %365 = vst.msk [vmem:[#allocation2 + $0x8] sm:$0xff] %vm174, %v363
    %366 = vrot.lane.b32.xlu0 %v158, 120
    %v367 = vpop.permute.xlu0 %366
    %368 = vrot.lane.b32.xlu0 %v163, 120
    %v369 = vpop.permute.xlu0 %368
    %370 = vrot.lane.b32.xlu0 %v158, 88
    %v371 = vpop.permute.xlu0 %370
    %372 = vrot.lane.b32.xlu0 %v163, 88
    %v373 = vpop.permute.xlu0 %372
    %v374 = vsel %vm174, %v367, 0
    %v376 = vsel %vm174, %v369, 0
    %v378 = vsel %vm174, %v371, 0
    %v380 = vsel %vm174, %v373, 0
    %382 = vmatprep.subr.mxu0 0.0
    %383 = vmatpush1.xpose.msra.mxu0 %v378
    %384 = vmatprep.subr.mxu0 0.0
    %385 = vmatpush1.xpose.msra.mxu0 %v380
    %386 = vmatprep.subr.mxu0 0.0
    %387 = vmatpush1.xpose.msra.mxu0 0.0
    %388 = vmatprep.subr.mxu0 0.0
    %389 = vmatpush1.xpose.msra.mxu0 0.0
    %390 = vmatprep.subr.mxu0 0.0
    %391 = vmatpush1.xpose.msra.mxu0 0.0
    %392 = vmatprep.subr.mxu0 0.0
    %393 = vmatpush1.xpose.msra.mxu0 0.0
    %394 = vmatprep.subr.mxu0 0.0
    %395 = vmatpush1.xpose.msra.mxu0 0.0
    %396 = vmatprep.subr.mxu0 0.0
    %397 = vmatpush1.xpose.msra.mxu0 0.0
    %398 = vmatprep.subr.mxu0 0.0
    %399 = vmatpush1.xpose.msra.mxu0 0.0
    %400 = vmatprep.subr.mxu0 0.0
    %401 = vmatpush1.xpose.msra.mxu0 0.0
    %402 = vmatprep.subr.mxu0 0.0
    %403 = vmatpush1.xpose.msra.mxu0 0.0
    %404 = vmatprep.subr.mxu0 0.0
    %405 = vmatpush1.xpose.msra.mxu0 0.0
    %406 = vmatprep.subr.mxu0 0.0
    %407 = vmatpush1.xpose.msra.mxu0 0.0
    %408 = vmatprep.subr.mxu0 0.0
    %409 = vmatpush1.xpose.msra.mxu0 0.0
    %410 = vmatprep.subr.mxu0 0.0
    %411 = vmatpush1.xpose.msra.mxu0 0.0
    %412 = vmatprep.subr.mxu0 0.0
    %413 = vmatpush1.xpose.msra.mxu0 0.0
    %414 = vmatprep.subr.mxu0 0.0
    %415 = vmatpush1.xpose.msra.mxu0 0.0
    %416 = vmatprep.subr.mxu0 0.0
    %417 = vmatpush1.xpose.msra.mxu0 0.0
    %418 = vmatprep.subr.mxu0 0.0
    %419 = vmatpush1.xpose.msra.mxu0 0.0
    %420 = vmatprep.subr.mxu0 0.0
    %421 = vmatpush1.xpose.msra.mxu0 0.0
    %422 = vmatprep.subr.mxu0 0.0
    %423 = vmatpush1.xpose.msra.mxu0 0.0
    %424 = vmatprep.subr.mxu0 0.0
    %425 = vmatpush1.xpose.msra.mxu0 0.0
    %426 = vmatprep.subr.mxu0 0.0
    %427 = vmatpush1.xpose.msra.mxu0 0.0
    %428 = vmatprep.subr.mxu0 0.0
    %429 = vmatpush1.xpose.msra.mxu0 0.0
    %430 = vmatprep.subr.mxu0 0.0
    %431 = vmatpush1.xpose.msra.mxu0 0.0
    %432 = vmatprep.subr.mxu0 0.0
    %433 = vmatpush1.xpose.msra.mxu0 0.0
    %434 = vmatprep.subr.mxu0 0.0
    %435 = vmatpush1.xpose.msra.mxu0 0.0
    %436 = vmatprep.subr.mxu0 0.0
    %437 = vmatpush1.xpose.msra.mxu0 0.0
    %438 = vmatprep.subr.mxu0 0.0
    %439 = vmatpush1.xpose.msra.mxu0 0.0
    %440 = vmatprep.subr.mxu0 0.0
    %441 = vmatpush1.xpose.msra.mxu0 0.0
    %442 = vmatprep.subr.mxu0 0.0
    %443 = vmatpush1.xpose.msra.mxu0 0.0
    %444 = vmatprep.subr.mxu0 0.0
    %445 = vmatpush1.xpose.msra.mxu0 0.0
    %446 = vmatprep.mubr.f32.mxu0 0.0
    %447 = vmatmul.mubr.f32.gmra.mrb[0].mxu0 %v374
    %v448 = vpop.f32.mrb[0].mxu0
    %v449 = vadd.f32 0.0, %v448
    %v450 = vpop.f32.mrb[0].mxu0
    %451 = vmatprep.mubr.f32.mxu0 0.0
    %452 = vmatmul.mubr.f32.gmra.mrb[0].mxu0 %v376
    %v453 = vpop.f32.mrb[0].mxu0
    %v454 = vadd.f32 0.0, %v453
    %v455 = vpop.f32.mrb[0].mxu0
    %456 = vdwg.mxu0
    %v457 = vmul.f32 %v449, 0.35355338
    %v458 = vmul.f32 %v454, 0.35355338
    %v459 = vadd.f32 %v457, %v166
    %v460 = vadd.f32 %v458, %v167
    %v461 = vmul.f32 %v459, 1.442695
    %v462 = vpow.pop %v461
    %v463 = vmul.f32 %v460, 1.442695
    %v464 = vpow.pop %v463
    %v465 = vsel %vm266, %v462, 0.0
    %466 = vadd.xlane.f32.xlu0 %v465
    %v467 = vpop.xlane.xlu0 %466
    %v468 = vsel %vm266, %v464, 0.0
    %469 = vadd.xlane.f32.xlu0 %v468
    %v470 = vpop.xlane.xlu0 %469
    %471 = vrot.lane.b32.xlu0 %v158, 56
    %v472 = vpop.permute.xlu0 %471
    %473 = vrot.lane.b32.xlu0 %v163, 56
    %v474 = vpop.permute.xlu0 %473
    %v478 = vsel %vm266, %v462, 0
    %v481 = vsel %vm266, %v464, 0
    %483 = vmatprep.subr.mxu0 0.0
    %484 = vmatpush1.msra.mxu0 %v472
    %485 = vmatprep.subr.mxu0 0.0
    %486 = vmatpush1.msra.mxu0 %v474
    %487 = vmatprep.subr.mxu0 0.0
    %488 = vmatpush1.msra.mxu0 0.0
    %489 = vmatprep.subr.mxu0 0.0
    %490 = vmatpush1.msra.mxu0 0.0
    %491 = vmatprep.subr.mxu0 0.0
    %492 = vmatpush1.msra.mxu0 0.0
    %493 = vmatprep.subr.mxu0 0.0
    %494 = vmatpush1.msra.mxu0 0.0
    %495 = vmatprep.subr.mxu0 0.0
    %496 = vmatpush1.msra.mxu0 0.0
    %497 = vmatprep.subr.mxu0 0.0
    %498 = vmatpush1.msra.mxu0 0.0
    %499 = vmatprep.subr.mxu0 0.0
    %500 = vmatpush1.msra.mxu0 0.0
    %501 = vmatprep.subr.mxu0 0.0
    %502 = vmatpush1.msra.mxu0 0.0
    %503 = vmatprep.subr.mxu0 0.0
    %504 = vmatpush1.msra.mxu0 0.0
    %505 = vmatprep.subr.mxu0 0.0
    %506 = vmatpush1.msra.mxu0 0.0
    %507 = vmatprep.subr.mxu0 0.0
    %508 = vmatpush1.msra.mxu0 0.0
    %509 = vmatprep.subr.mxu0 0.0
    %510 = vmatpush1.msra.mxu0 0.0
    %511 = vmatprep.subr.mxu0 0.0
    %512 = vmatpush1.msra.mxu0 0.0
    %513 = vmatprep.subr.mxu0 0.0
    %514 = vmatpush1.msra.mxu0 0.0
    %515 = vmatprep.subr.mxu0 0.0
    %516 = vmatpush1.msra.mxu0 0.0
    %517 = vmatprep.subr.mxu0 0.0
    %518 = vmatpush1.msra.mxu0 0.0
    %519 = vmatprep.subr.mxu0 0.0
    %520 = vmatpush1.msra.mxu0 0.0
    %521 = vmatprep.subr.mxu0 0.0
    %522 = vmatpush1.msra.mxu0 0.0
    %523 = vmatprep.subr.mxu0 0.0
    %524 = vmatpush1.msra.mxu0 0.0
    %525 = vmatprep.subr.mxu0 0.0
    %526 = vmatpush1.msra.mxu0 0.0
    %527 = vmatprep.subr.mxu0 0.0
    %528 = vmatpush1.msra.mxu0 0.0
    %529 = vmatprep.subr.mxu0 0.0
    %530 = vmatpush1.msra.mxu0 0.0
    %531 = vmatprep.subr.mxu0 0.0
    %532 = vmatpush1.msra.mxu0 0.0
    %533 = vmatprep.subr.mxu0 0.0
    %534 = vmatpush1.msra.mxu0 0.0
    %535 = vmatprep.subr.mxu0 0.0
    %536 = vmatpush1.msra.mxu0 0.0
    %537 = vmatprep.subr.mxu0 0.0
    %538 = vmatpush1.msra.mxu0 0.0
    %539 = vmatprep.subr.mxu0 0.0
    %540 = vmatpush1.msra.mxu0 0.0
    %541 = vmatprep.subr.mxu0 0.0
    %542 = vmatpush1.msra.mxu0 0.0
    %543 = vmatprep.subr.mxu0 0.0
    %544 = vmatpush1.msra.mxu0 0.0
    %545 = vmatprep.subr.mxu0 0.0
    %546 = vmatpush1.msra.mxu0 0.0
    %547 = vmatprep.mubr.f32.mxu0 0.0
    %548 = vmatmul.mubr.f32.gmra.mrb[0].mxu0 %v478
    %v549 = vpop.f32.mrb[0].mxu0
    %v550 = vadd.f32 0.0, %v549
    %v551 = vpop.f32.mrb[0].mxu0
    %552 = vmatprep.mubr.f32.mxu0 0.0
    %553 = vmatmul.mubr.f32.gmra.mrb[0].mxu0 %v481
    %v554 = vpop.f32.mrb[0].mxu0
    %v555 = vadd.f32 0.0, %v554
    %v556 = vpop.f32.mrb[0].mxu0
    %557 = vdwg.mxu0
    %v558 = vrcp.pop %v467
    %v559 = vmul.f32 %v550, %v558
    %v560 = vrcp.pop %v470
    %v561 = vmul.f32 %v555, %v560
    %564 = vrot.lane.b32.xlu0 %v559, 8
    %v565 = vpop.permute.xlu0 %564
    %566 = vrot.lane.b32.xlu0 %v561, 8
    %v567 = vpop.permute.xlu0 %566
    %vm570 = vcmask 130112
    %571 = vst.msk [vmem:[#allocation2] sm:$0xff] %vm570, %v565
    %572 = vst.msk [vmem:[#allocation2 + $0x8] sm:$0xff] %vm570, %v567
    %573 = vrot.lane.b32.xlu0 %v158, 112
    %v574 = vpop.permute.xlu0 %573
    %575 = vrot.lane.b32.xlu0 %v163, 112
    %v576 = vpop.permute.xlu0 %575
    %577 = vrot.lane.b32.xlu0 %v158, 80
    %v578 = vpop.permute.xlu0 %577
    %579 = vrot.lane.b32.xlu0 %v163, 80
    %v580 = vpop.permute.xlu0 %579
    %v581 = vsel %vm174, %v574, 0
    %v583 = vsel %vm174, %v576, 0
    %v585 = vsel %vm174, %v578, 0
    %v587 = vsel %vm174, %v580, 0
    %589 = vmatprep.subr.mxu0 0.0
    %590 = vmatpush1.xpose.msra.mxu0 %v585
    %591 = vmatprep.subr.mxu0 0.0
    %592 = vmatpush1.xpose.msra.mxu0 %v587
    %593 = vmatprep.subr.mxu0 0.0
    %594 = vmatpush1.xpose.msra.mxu0 0.0
    %595 = vmatprep.subr.mxu0 0.0
    %596 = vmatpush1.xpose.msra.mxu0 0.0
    %597 = vmatprep.subr.mxu0 0.0
    %598 = vmatpush1.xpose.msra.mxu0 0.0
    %599 = vmatprep.subr.mxu0 0.0
    %600 = vmatpush1.xpose.msra.mxu0 0.0
    %601 = vmatprep.subr.mxu0 0.0
    %602 = vmatpush1.xpose.msra.mxu0 0.0
    %603 = vmatprep.subr.mxu0 0.0
    %604 = vmatpush1.xpose.msra.mxu0 0.0
    %605 = vmatprep.subr.mxu0 0.0
    %606 = vmatpush1.xpose.msra.mxu0 0.0
    %607 = vmatprep.subr.mxu0 0.0
    %608 = vmatpush1.xpose.msra.mxu0 0.0
    %609 = vmatprep.subr.mxu0 0.0
    %610 = vmatpush1.xpose.msra.mxu0 0.0
    %611 = vmatprep.subr.mxu0 0.0
    %612 = vmatpush1.xpose.msra.mxu0 0.0
    %613 = vmatprep.subr.mxu0 0.0
    %614 = vmatpush1.xpose.msra.mxu0 0.0
    %615 = vmatprep.subr.mxu0 0.0
    %616 = vmatpush1.xpose.msra.mxu0 0.0
    %617 = vmatprep.subr.mxu0 0.0
    %618 = vmatpush1.xpose.msra.mxu0 0.0
    %619 = vmatprep.subr.mxu0 0.0
    %620 = vmatpush1.xpose.msra.mxu0 0.0
    %621 = vmatprep.subr.mxu0 0.0
    %622 = vmatpush1.xpose.msra.mxu0 0.0
    %623 = vmatprep.subr.mxu0 0.0
    %624 = vmatpush1.xpose.msra.mxu0 0.0
    %625 = vmatprep.subr.mxu0 0.0
    %626 = vmatpush1.xpose.msra.mxu0 0.0
    %627 = vmatprep.subr.mxu0 0.0
    %628 = vmatpush1.xpose.msra.mxu0 0.0
    %629 = vmatprep.subr.mxu0 0.0
    %630 = vmatpush1.xpose.msra.mxu0 0.0
    %631 = vmatprep.subr.mxu0 0.0
    %632 = vmatpush1.xpose.msra.mxu0 0.0
    %633 = vmatprep.subr.mxu0 0.0
    %634 = vmatpush1.xpose.msra.mxu0 0.0
    %635 = vmatprep.subr.mxu0 0.0
    %636 = vmatpush1.xpose.msra.mxu0 0.0
    %637 = vmatprep.subr.mxu0 0.0
    %638 = vmatpush1.xpose.msra.mxu0 0.0
    %639 = vmatprep.subr.mxu0 0.0
    %640 = vmatpush1.xpose.msra.mxu0 0.0
    %641 = vmatprep.subr.mxu0 0.0
    %642 = vmatpush1.xpose.msra.mxu0 0.0
    %643 = vmatprep.subr.mxu0 0.0
    %644 = vmatpush1.xpose.msra.mxu0 0.0
    %645 = vmatprep.subr.mxu0 0.0
    %646 = vmatpush1.xpose.msra.mxu0 0.0
    %647 = vmatprep.subr.mxu0 0.0
    %648 = vmatpush1.xpose.msra.mxu0 0.0
    %649 = vmatprep.subr.mxu0 0.0
    %650 = vmatpush1.xpose.msra.mxu0 0.0
    %651 = vmatprep.subr.mxu0 0.0
    %652 = vmatpush1.xpose.msra.mxu0 0.0
    %653 = vmatprep.mubr.f32.mxu0 0.0
    %654 = vmatmul.mubr.f32.gmra.mrb[0].mxu0 %v581
    %v655 = vpop.f32.mrb[0].mxu0
    %v656 = vadd.f32 0.0, %v655
    %v657 = vpop.f32.mrb[0].mxu0
    %658 = vmatprep.mubr.f32.mxu0 0.0
    %659 = vmatmul.mubr.f32.gmra.mrb[0].mxu0 %v583
    %v660 = vpop.f32.mrb[0].mxu0
    %v661 = vadd.f32 0.0, %v660
    %v662 = vpop.f32.mrb[0].mxu0
    %663 = vdwg.mxu0
    %v664 = vmul.f32 %v656, 0.35355338
    %v665 = vmul.f32 %v661, 0.35355338
    %v666 = vadd.f32 %v664, %v166
    %v667 = vadd.f32 %v665, %v167
    %v668 = vmul.f32 %v666, 1.442695
    %v669 = vpow.pop %v668
    %v670 = vmul.f32 %v667, 1.442695
    %v671 = vpow.pop %v670
    %v672 = vsel %vm266, %v669, 0.0
    %673 = vadd.xlane.f32.xlu0 %v672
    %v674 = vpop.xlane.xlu0 %673
    %v675 = vsel %vm266, %v671, 0.0
    %676 = vadd.xlane.f32.xlu0 %v675
    %v677 = vpop.xlane.xlu0 %676
    %678 = vrot.lane.b32.xlu0 %v158, 48
    %v679 = vpop.permute.xlu0 %678
    %680 = vrot.lane.b32.xlu0 %v163, 48
    %v681 = vpop.permute.xlu0 %680
    %v685 = vsel %vm266, %v669, 0
    %v688 = vsel %vm266, %v671, 0
    %690 = vmatprep.subr.mxu0 0.0
    %691 = vmatpush1.msra.mxu0 %v679
    %692 = vmatprep.subr.mxu0 0.0
    %693 = vmatpush1.msra.mxu0 %v681
    %694 = vmatprep.subr.mxu0 0.0
    %695 = vmatpush1.msra.mxu0 0.0
    %696 = vmatprep.subr.mxu0 0.0
    %697 = vmatpush1.msra.mxu0 0.0
    %698 = vmatprep.subr.mxu0 0.0
    %699 = vmatpush1.msra.mxu0 0.0
    %700 = vmatprep.subr.mxu0 0.0
    %701 = vmatpush1.msra.mxu0 0.0
    %702 = vmatprep.subr.mxu0 0.0
    %703 = vmatpush1.msra.mxu0 0.0
    %704 = vmatprep.subr.mxu0 0.0
    %705 = vmatpush1.msra.mxu0 0.0
    %706 = vmatprep.subr.mxu0 0.0
    %707 = vmatpush1.msra.mxu0 0.0
    %708 = vmatprep.subr.mxu0 0.0
    %709 = vmatpush1.msra.mxu0 0.0
    %710 = vmatprep.subr.mxu0 0.0
    %711 = vmatpush1.msra.mxu0 0.0
    %712 = vmatprep.subr.mxu0 0.0
    %713 = vmatpush1.msra.mxu0 0.0
    %714 = vmatprep.subr.mxu0 0.0
    %715 = vmatpush1.msra.mxu0 0.0
    %716 = vmatprep.subr.mxu0 0.0
    %717 = vmatpush1.msra.mxu0 0.0
    %718 = vmatprep.subr.mxu0 0.0
    %719 = vmatpush1.msra.mxu0 0.0
    %720 = vmatprep.subr.mxu0 0.0
    %721 = vmatpush1.msra.mxu0 0.0
    %722 = vmatprep.subr.mxu0 0.0
    %723 = vmatpush1.msra.mxu0 0.0
    %724 = vmatprep.subr.mxu0 0.0
    %725 = vmatpush1.msra.mxu0 0.0
    %726 = vmatprep.subr.mxu0 0.0
    %727 = vmatpush1.msra.mxu0 0.0
    %728 = vmatprep.subr.mxu0 0.0
    %729 = vmatpush1.msra.mxu0 0.0
    %730 = vmatprep.subr.mxu0 0.0
    %731 = vmatpush1.msra.mxu0 0.0
    %732 = vmatprep.subr.mxu0 0.0
    %733 = vmatpush1.msra.mxu0 0.0
    %734 = vmatprep.subr.mxu0 0.0
    %735 = vmatpush1.msra.mxu0 0.0
    %736 = vmatprep.subr.mxu0 0.0
    %737 = vmatpush1.msra.mxu0 0.0
    %738 = vmatprep.subr.mxu0 0.0
    %739 = vmatpush1.msra.mxu0 0.0
    %740 = vmatprep.subr.mxu0 0.0
    %741 = vmatpush1.msra.mxu0 0.0
    %742 = vmatprep.subr.mxu0 0.0
    %743 = vmatpush1.msra.mxu0 0.0
    %744 = vmatprep.subr.mxu0 0.0
    %745 = vmatpush1.msra.mxu0 0.0
    %746 = vmatprep.subr.mxu0 0.0
    %747 = vmatpush1.msra.mxu0 0.0
    %748 = vmatprep.subr.mxu0 0.0
    %749 = vmatpush1.msra.mxu0 0.0
    %750 = vmatprep.subr.mxu0 0.0
    %751 = vmatpush1.msra.mxu0 0.0
    %752 = vmatprep.subr.mxu0 0.0
    %753 = vmatpush1.msra.mxu0 0.0
    %754 = vmatprep.mubr.f32.mxu0 0.0
    %755 = vmatmul.mubr.f32.gmra.mrb[0].mxu0 %v685
    %v756 = vpop.f32.mrb[0].mxu0
    %v757 = vadd.f32 0.0, %v756
    %v758 = vpop.f32.mrb[0].mxu0
    %759 = vmatprep.mubr.f32.mxu0 0.0
    %760 = vmatmul.mubr.f32.gmra.mrb[0].mxu0 %v688
    %v761 = vpop.f32.mrb[0].mxu0
    %v762 = vadd.f32 0.0, %v761
    %v763 = vpop.f32.mrb[0].mxu0
    %764 = vdwg.mxu0
    %v765 = vrcp.pop %v674
    %v766 = vmul.f32 %v757, %v765
    %v767 = vrcp.pop %v677
    %v768 = vmul.f32 %v762, %v767
    %771 = vrot.lane.b32.xlu0 %v766, 16
    %v772 = vpop.permute.xlu0 %771
    %773 = vrot.lane.b32.xlu0 %v768, 16
    %v774 = vpop.permute.xlu0 %773
    %vm777 = vcmask 195712
    %778 = vst.msk [vmem:[#allocation2] sm:$0xff] %vm777, %v772
    %779 = vst.msk [vmem:[#allocation2 + $0x8] sm:$0xff] %vm777, %v774
    %780 = vrot.lane.b32.xlu0 %v158, 104
    %v781 = vpop.permute.xlu0 %780
    %782 = vrot.lane.b32.xlu0 %v163, 104
    %v783 = vpop.permute.xlu0 %782
    %784 = vrot.lane.b32.xlu0 %v158, 72
    %v785 = vpop.permute.xlu0 %784
    %786 = vrot.lane.b32.xlu0 %v163, 72
    %v787 = vpop.permute.xlu0 %786
    %v788 = vsel %vm174, %v781, 0
    %v790 = vsel %vm174, %v783, 0
    %v792 = vsel %vm174, %v785, 0
    %v794 = vsel %vm174, %v787, 0
    %796 = vmatprep.subr.mxu0 0.0
    %797 = vmatpush1.xpose.msra.mxu0 %v792
    %798 = vmatprep.subr.mxu0 0.0
    %799 = vmatpush1.xpose.msra.mxu0 %v794
    %800 = vmatprep.subr.mxu0 0.0
    %801 = vmatpush1.xpose.msra.mxu0 0.0
    %802 = vmatprep.subr.mxu0 0.0
    %803 = vmatpush1.xpose.msra.mxu0 0.0
    %804 = vmatprep.subr.mxu0 0.0
    %805 = vmatpush1.xpose.msra.mxu0 0.0
    %806 = vmatprep.subr.mxu0 0.0
    %807 = vmatpush1.xpose.msra.mxu0 0.0
    %808 = vmatprep.subr.mxu0 0.0
    %809 = vmatpush1.xpose.msra.mxu0 0.0
    %810 = vmatprep.subr.mxu0 0.0
    %811 = vmatpush1.xpose.msra.mxu0 0.0
    %812 = vmatprep.subr.mxu0 0.0
    %813 = vmatpush1.xpose.msra.mxu0 0.0
    %814 = vmatprep.subr.mxu0 0.0
    %815 = vmatpush1.xpose.msra.mxu0 0.0
    %816 = vmatprep.subr.mxu0 0.0
    %817 = vmatpush1.xpose.msra.mxu0 0.0
    %818 = vmatprep.subr.mxu0 0.0
    %819 = vmatpush1.xpose.msra.mxu0 0.0
    %820 = vmatprep.subr.mxu0 0.0
    %821 = vmatpush1.xpose.msra.mxu0 0.0
    %822 = vmatprep.subr.mxu0 0.0
    %823 = vmatpush1.xpose.msra.mxu0 0.0
    %824 = vmatprep.subr.mxu0 0.0
    %825 = vmatpush1.xpose.msra.mxu0 0.0
    %826 = vmatprep.subr.mxu0 0.0
    %827 = vmatpush1.xpose.msra.mxu0 0.0
    %828 = vmatprep.subr.mxu0 0.0
    %829 = vmatpush1.xpose.msra.mxu0 0.0
    %830 = vmatprep.subr.mxu0 0.0
    %831 = vmatpush1.xpose.msra.mxu0 0.0
    %832 = vmatprep.subr.mxu0 0.0
    %833 = vmatpush1.xpose.msra.mxu0 0.0
    %834 = vmatprep.subr.mxu0 0.0
    %835 = vmatpush1.xpose.msra.mxu0 0.0
    %836 = vmatprep.subr.mxu0 0.0
    %837 = vmatpush1.xpose.msra.mxu0 0.0
    %838 = vmatprep.subr.mxu0 0.0
    %839 = vmatpush1.xpose.msra.mxu0 0.0
    %840 = vmatprep.subr.mxu0 0.0
    %841 = vmatpush1.xpose.msra.mxu0 0.0
    %842 = vmatprep.subr.mxu0 0.0
    %843 = vmatpush1.xpose.msra.mxu0 0.0
    %844 = vmatprep.subr.mxu0 0.0
    %845 = vmatpush1.xpose.msra.mxu0 0.0
    %846 = vmatprep.subr.mxu0 0.0
    %847 = vmatpush1.xpose.msra.mxu0 0.0
    %848 = vmatprep.subr.mxu0 0.0
    %849 = vmatpush1.xpose.msra.mxu0 0.0
    %850 = vmatprep.subr.mxu0 0.0
    %851 = vmatpush1.xpose.msra.mxu0 0.0
    %852 = vmatprep.subr.mxu0 0.0
    %853 = vmatpush1.xpose.msra.mxu0 0.0
    %854 = vmatprep.subr.mxu0 0.0
    %855 = vmatpush1.xpose.msra.mxu0 0.0
    %856 = vmatprep.subr.mxu0 0.0
    %857 = vmatpush1.xpose.msra.mxu0 0.0
    %858 = vmatprep.subr.mxu0 0.0
    %859 = vmatpush1.xpose.msra.mxu0 0.0
    %860 = vmatprep.mubr.f32.mxu0 0.0
    %861 = vmatmul.mubr.f32.gmra.mrb[0].mxu0 %v788
    %v862 = vpop.f32.mrb[0].mxu0
    %v863 = vadd.f32 0.0, %v862
    %v864 = vpop.f32.mrb[0].mxu0
    %865 = vmatprep.mubr.f32.mxu0 0.0
    %866 = vmatmul.mubr.f32.gmra.mrb[0].mxu0 %v790
    %v867 = vpop.f32.mrb[0].mxu0
    %v868 = vadd.f32 0.0, %v867
    %v869 = vpop.f32.mrb[0].mxu0
    %870 = vdwg.mxu0
    %v871 = vmul.f32 %v863, 0.35355338
    %v872 = vmul.f32 %v868, 0.35355338
    %v873 = vadd.f32 %v871, %v166
    %v874 = vadd.f32 %v872, %v167
    %v875 = vmul.f32 %v873, 1.442695
    %v876 = vpow.pop %v875
    %v877 = vmul.f32 %v874, 1.442695
    %v878 = vpow.pop %v877
    %v879 = vsel %vm266, %v876, 0.0
    %880 = vadd.xlane.f32.xlu0 %v879
    %v881 = vpop.xlane.xlu0 %880
    %v882 = vsel %vm266, %v878, 0.0
    %883 = vadd.xlane.f32.xlu0 %v882
    %v884 = vpop.xlane.xlu0 %883
    %885 = vrot.lane.b32.xlu0 %v158, 40
    %v886 = vpop.permute.xlu0 %885
    %887 = vrot.lane.b32.xlu0 %v163, 40
    %v888 = vpop.permute.xlu0 %887
    %v892 = vsel %vm266, %v876, 0
    %v895 = vsel %vm266, %v878, 0
    %897 = vmatprep.subr.mxu0 0.0
    %898 = vmatpush1.msra.mxu0 %v886
    %899 = vmatprep.subr.mxu0 0.0
    %900 = vmatpush1.msra.mxu0 %v888
    %901 = vmatprep.subr.mxu0 0.0
    %902 = vmatpush1.msra.mxu0 0.0
    %903 = vmatprep.subr.mxu0 0.0
    %904 = vmatpush1.msra.mxu0 0.0
    %905 = vmatprep.subr.mxu0 0.0
    %906 = vmatpush1.msra.mxu0 0.0
    %907 = vmatprep.subr.mxu0 0.0
    %908 = vmatpush1.msra.mxu0 0.0
    %909 = vmatprep.subr.mxu0 0.0
    %910 = vmatpush1.msra.mxu0 0.0
    %911 = vmatprep.subr.mxu0 0.0
    %912 = vmatpush1.msra.mxu0 0.0
    %913 = vmatprep.subr.mxu0 0.0
    %914 = vmatpush1.msra.mxu0 0.0
    %915 = vmatprep.subr.mxu0 0.0
    %916 = vmatpush1.msra.mxu0 0.0
    %917 = vmatprep.subr.mxu0 0.0
    %918 = vmatpush1.msra.mxu0 0.0
    %919 = vmatprep.subr.mxu0 0.0
    %920 = vmatpush1.msra.mxu0 0.0
    %921 = vmatprep.subr.mxu0 0.0
    %922 = vmatpush1.msra.mxu0 0.0
    %923 = vmatprep.subr.mxu0 0.0
    %924 = vmatpush1.msra.mxu0 0.0
    %925 = vmatprep.subr.mxu0 0.0
    %926 = vmatpush1.msra.mxu0 0.0
    %927 = vmatprep.subr.mxu0 0.0
    %928 = vmatpush1.msra.mxu0 0.0
    %929 = vmatprep.subr.mxu0 0.0
    %930 = vmatpush1.msra.mxu0 0.0
    %931 = vmatprep.subr.mxu0 0.0
    %932 = vmatpush1.msra.mxu0 0.0
    %933 = vmatprep.subr.mxu0 0.0
    %934 = vmatpush1.msra.mxu0 0.0
    %935 = vmatprep.subr.mxu0 0.0
    %936 = vmatpush1.msra.mxu0 0.0
    %937 = vmatprep.subr.mxu0 0.0
    %938 = vmatpush1.msra.mxu0 0.0
    %939 = vmatprep.subr.mxu0 0.0
    %940 = vmatpush1.msra.mxu0 0.0
    %941 = vmatprep.subr.mxu0 0.0
    %942 = vmatpush1.msra.mxu0 0.0
    %943 = vmatprep.subr.mxu0 0.0
    %944 = vmatpush1.msra.mxu0 0.0
    %945 = vmatprep.subr.mxu0 0.0
    %946 = vmatpush1.msra.mxu0 0.0
    %947 = vmatprep.subr.mxu0 0.0
    %948 = vmatpush1.msra.mxu0 0.0
    %949 = vmatprep.subr.mxu0 0.0
    %950 = vmatpush1.msra.mxu0 0.0
    %951 = vmatprep.subr.mxu0 0.0
    %952 = vmatpush1.msra.mxu0 0.0
    %953 = vmatprep.subr.mxu0 0.0
    %954 = vmatpush1.msra.mxu0 0.0
    %955 = vmatprep.subr.mxu0 0.0
    %956 = vmatpush1.msra.mxu0 0.0
    %957 = vmatprep.subr.mxu0 0.0
    %958 = vmatpush1.msra.mxu0 0.0
    %959 = vmatprep.subr.mxu0 0.0
    %960 = vmatpush1.msra.mxu0 0.0
    %961 = vmatprep.mubr.f32.mxu0 0.0
    %962 = vmatmul.mubr.f32.gmra.mrb[0].mxu0 %v892
    %v963 = vpop.f32.mrb[0].mxu0
    %v964 = vadd.f32 0.0, %v963
    %v965 = vpop.f32.mrb[0].mxu0
    %966 = vmatprep.mubr.f32.mxu0 0.0
    %967 = vmatmul.mubr.f32.gmra.mrb[0].mxu0 %v895
    %v968 = vpop.f32.mrb[0].mxu0
    %v969 = vadd.f32 0.0, %v968
    %v970 = vpop.f32.mrb[0].mxu0
    %971 = vdwg.mxu0
    %v972 = vrcp.pop %v881
    %v973 = vmul.f32 %v964, %v972
    %v974 = vrcp.pop %v884
    %v975 = vmul.f32 %v969, %v974
    %978 = vrot.lane.b32.xlu0 %v973, 24
    %v979 = vpop.permute.xlu0 %978
    %980 = vrot.lane.b32.xlu0 %v975, 24
    %v981 = vpop.permute.xlu0 %980
    %vm984 = vcmask 261312
    %985 = vst.msk [vmem:[#allocation2] sm:$0xff] %vm984, %v979
    %986 = vst.msk [vmem:[#allocation2 + $0x8] sm:$0xff] %vm984, %v981
    %v987 = vld [vmem:[#allocation2] sm:$0xff]
    %v988 = vld [vmem:[#allocation2 + $0x8] sm:$0xff]
    %v989 = vld [vmem:[%s4] sm:$0xff]
    %v990 = vld [vmem:[%s4 + $0x8] sm:$0xff]
    %v991 = vld [vmem:[%s4 + $0x10] sm:$0xff]
    %v992 = vld [vmem:[%s4 + $0x18] sm:$0xff]
    %v993 = vlaneseq
    %v994 = vshrl.u32 %v993, 7
    %v995 = vsub.s32 0, %v994
    %v996 = vrot.slane %v33, %v995
    %v998 = vsel %vm37, %v987, 0
    %v1001 = vsel %vm37, %v988, 0
    %1003 = vmatprep.subr.mxu0 0.0
    %1004 = vmatpush1.msra.mxu0 %v989
    %1005 = vmatprep.subr.mxu0 0.0
    %1006 = vmatpush1.msra.mxu0 %v990
    %1007 = vmatprep.subr.mxu0 0.0
    %1008 = vmatpush1.msra.mxu0 %v991
    %1009 = vmatprep.subr.mxu0 0.0
    %1010 = vmatpush1.msra.mxu0 %v992
    %1011 = vmatprep.subr.mxu0 0.0
    %1012 = vmatpush1.msra.mxu0 0.0
    %1013 = vmatprep.subr.mxu0 0.0
    %1014 = vmatpush1.msra.mxu0 0.0
    %1015 = vmatprep.subr.mxu0 0.0
    %1016 = vmatpush1.msra.mxu0 0.0
    %1017 = vmatprep.subr.mxu0 0.0
    %1018 = vmatpush1.msra.mxu0 0.0
    %1019 = vmatprep.subr.mxu0 0.0
    %1020 = vmatpush1.msra.mxu0 0.0
    %1021 = vmatprep.subr.mxu0 0.0
    %1022 = vmatpush1.msra.mxu0 0.0
    %1023 = vmatprep.subr.mxu0 0.0
    %1024 = vmatpush1.msra.mxu0 0.0
    %1025 = vmatprep.subr.mxu0 0.0
    %1026 = vmatpush1.msra.mxu0 0.0
    %1027 = vmatprep.subr.mxu0 0.0
    %1028 = vmatpush1.msra.mxu0 0.0
    %1029 = vmatprep.subr.mxu0 0.0
    %1030 = vmatpush1.msra.mxu0 0.0
    %1031 = vmatprep.subr.mxu0 0.0
    %1032 = vmatpush1.msra.mxu0 0.0
    %1033 = vmatprep.subr.mxu0 0.0
    %1034 = vmatpush1.msra.mxu0 0.0
    %1035 = vmatprep.subr.mxu0 0.0
    %1036 = vmatpush1.msra.mxu0 0.0
    %1037 = vmatprep.subr.mxu0 0.0
    %1038 = vmatpush1.msra.mxu0 0.0
    %1039 = vmatprep.subr.mxu0 0.0
    %1040 = vmatpush1.msra.mxu0 0.0
    %1041 = vmatprep.subr.mxu0 0.0
    %1042 = vmatpush1.msra.mxu0 0.0
    %1043 = vmatprep.subr.mxu0 0.0
    %1044 = vmatpush1.msra.mxu0 0.0
    %1045 = vmatprep.subr.mxu0 0.0
    %1046 = vmatpush1.msra.mxu0 0.0
    %1047 = vmatprep.subr.mxu0 0.0
    %1048 = vmatpush1.msra.mxu0 0.0
    %1049 = vmatprep.subr.mxu0 0.0
    %1050 = vmatpush1.msra.mxu0 0.0
    %1051 = vmatprep.subr.mxu0 0.0
    %1052 = vmatpush1.msra.mxu0 0.0
    %1053 = vmatprep.subr.mxu0 0.0
    %1054 = vmatpush1.msra.mxu0 0.0
    %1055 = vmatprep.subr.mxu0 0.0
    %1056 = vmatpush1.msra.mxu0 0.0
    %1057 = vmatprep.subr.mxu0 0.0
    %1058 = vmatpush1.msra.mxu0 0.0
    %1059 = vmatprep.subr.mxu0 0.0
    %1060 = vmatpush1.msra.mxu0 0.0
    %1061 = vmatprep.subr.mxu0 0.0
    %1062 = vmatpush1.msra.mxu0 0.0
    %1063 = vmatprep.subr.mxu0 0.0
    %1064 = vmatpush1.msra.mxu0 0.0
    %1065 = vmatprep.subr.mxu0 0.0
    %1066 = vmatpush1.msra.mxu0 0.0
    %1067 = vmatprep.mubr.f32.mxu0 0.0
    %1068 = vmatmul.mubr.f32.gmra.mrb[0].mxu0 %v998
    %v1069 = vpop.f32.mrb[0].mxu0
    %v1070 = vadd.f32 %v996, %v1069
    %v1071 = vpop.f32.mrb[0].mxu0
    %1072 = vmatprep.mubr.f32.mxu0 0.0
    %1073 = vmatmul.mubr.f32.gmra.mrb[0].mxu0 %v1001
    %v1074 = vpop.f32.mrb[0].mxu0
    %v1075 = vadd.f32 %v996, %v1074
    %v1076 = vpop.f32.mrb[0].mxu0
    %1077 = vdwg.mxu0
    %v1078 = vadd.f32 %v27, %v1070
    %v1079 = vadd.f32 %v28, %v1075
    %v1080 = vsel %vm37, %v1078, 0.0
    %1081 = vadd.xlane.f32.xlu0 %v1080
    %v1082 = vpop.xlane.xlu0 %1081
    %v1083 = vsel %vm37, %v1079, 0.0
    %1084 = vadd.xlane.f32.xlu0 %v1083
    %v1085 = vpop.xlane.xlu0 %1084
    %v1086 = vmul.f32 %v1082, %v44
    %v1087 = vmul.f32 %v1085, %v44
    %v1088 = vsub.f32 %v1078, %v1086
    %v1089 = vsub.f32 %v1079, %v1087
    %v1090 = vmul.f32 %v1088, %v1088
    %v1091 = vmul.f32 %v1089, %v1089
    %v1092 = vsel %vm37, %v1090, 0.0
    %1093 = vadd.xlane.f32.xlu0 %v1092
    %v1094 = vpop.xlane.xlu0 %1093
    %v1095 = vsel %vm37, %v1091, 0.0
    %1096 = vadd.xlane.f32.xlu0 %v1095
    %v1097 = vpop.xlane.xlu0 %1096
    %v1098 = vmul.f32 %v1094, %v44
    %v1099 = vmul.f32 %v1097, %v44
    %v1100 = vadd.f32 %v1098, 1e-05
    %v1101 = vadd.f32 %v1099, 1e-05
    %v1102 = vrsqrt.pop %v1100
    %v1103 = vrsqrt.pop %v1101
    %v1104 = vmul.f32 %v1088, %v1102
    %v1105 = vmul.f32 %v1089, %v1103
    %v1106 = vlaneseq
    %v1107 = vshrl.u32 %v1106, 7
    %v1108 = vsub.s32 0, %v1107
    %v1109 = vrot.slane %v31, %v1108
    %v1110 = vmul.f32 %v1104, %v1109
    %v1111 = vmul.f32 %v1105, %v1109
    %v1112 = vlaneseq
    %v1113 = vshrl.u32 %v1112, 7
    %v1114 = vsub.s32 0, %v1113
    %v1115 = vrot.slane %v32, %v1114
    %v1116 = vadd.f32 %v1110, %v1115
    %v1117 = vadd.f32 %v1111, %v1115
    %v1118 = vld [vmem:[%s5] sm:$0xff]
    %v1119 = vld [vmem:[%s5 + $0x8] sm:$0xff]
    %v1120 = vld [vmem:[%s5 + $0x10] sm:$0xff]
    %v1121 = vld [vmem:[%s5 + $0x18] sm:$0xff]
    %v1122 = vlaneseq
    %v1123 = vshrl.u32 %v1122, 7
    %v1124 = vsub.s32 0, %v1123
    %v1125 = vrot.slane %v35, %v1124
    %v1127 = vsel %vm37, %v1116, 0
    %v1130 = vsel %vm37, %v1117, 0
    %1132 = vmatprep.subr.mxu0 0.0
    %1133 = vmatpush1.msra.mxu0 %v1118
    %1134 = vmatprep.subr.mxu0 0.0
    %1135 = vmatpush1.msra.mxu0 %v1119
    %1136 = vmatprep.subr.mxu0 0.0
    %1137 = vmatpush1.msra.mxu0 %v1120
    %1138 = vmatprep.subr.mxu0 0.0
    %1139 = vmatpush1.msra.mxu0 %v1121
    %1140 = vmatprep.subr.mxu0 0.0
    %1141 = vmatpush1.msra.mxu0 0.0
    %1142 = vmatprep.subr.mxu0 0.0
    %1143 = vmatpush1.msra.mxu0 0.0
    %1144 = vmatprep.subr.mxu0 0.0
    %1145 = vmatpush1.msra.mxu0 0.0
    %1146 = vmatprep.subr.mxu0 0.0
    %1147 = vmatpush1.msra.mxu0 0.0
    %1148 = vmatprep.subr.mxu0 0.0
    %1149 = vmatpush1.msra.mxu0 0.0
    %1150 = vmatprep.subr.mxu0 0.0
    %1151 = vmatpush1.msra.mxu0 0.0
    %1152 = vmatprep.subr.mxu0 0.0
    %1153 = vmatpush1.msra.mxu0 0.0
    %1154 = vmatprep.subr.mxu0 0.0
    %1155 = vmatpush1.msra.mxu0 0.0
    %1156 = vmatprep.subr.mxu0 0.0
    %1157 = vmatpush1.msra.mxu0 0.0
    %1158 = vmatprep.subr.mxu0 0.0
    %1159 = vmatpush1.msra.mxu0 0.0
    %1160 = vmatprep.subr.mxu0 0.0
    %1161 = vmatpush1.msra.mxu0 0.0
    %1162 = vmatprep.subr.mxu0 0.0
    %1163 = vmatpush1.msra.mxu0 0.0
    %1164 = vmatprep.subr.mxu0 0.0
    %1165 = vmatpush1.msra.mxu0 0.0
    %1166 = vmatprep.subr.mxu0 0.0
    %1167 = vmatpush1.msra.mxu0 0.0
    %1168 = vmatprep.subr.mxu0 0.0
    %1169 = vmatpush1.msra.mxu0 0.0
    %1170 = vmatprep.subr.mxu0 0.0
    %1171 = vmatpush1.msra.mxu0 0.0
    %1172 = vmatprep.subr.mxu0 0.0
    %1173 = vmatpush1.msra.mxu0 0.0
    %1174 = vmatprep.subr.mxu0 0.0
    %1175 = vmatpush1.msra.mxu0 0.0
    %1176 = vmatprep.subr.mxu0 0.0
    %1177 = vmatpush1.msra.mxu0 0.0
    %1178 = vmatprep.subr.mxu0 0.0
    %1179 = vmatpush1.msra.mxu0 0.0
    %1180 = vmatprep.subr.mxu0 0.0
    %1181 = vmatpush1.msra.mxu0 0.0
    %1182 = vmatprep.subr.mxu0 0.0
    %1183 = vmatpush1.msra.mxu0 0.0
    %1184 = vmatprep.subr.mxu0 0.0
    %1185 = vmatpush1.msra.mxu0 0.0
    %1186 = vmatprep.subr.mxu0 0.0
    %1187 = vmatpush1.msra.mxu0 0.0
    %1188 = vmatprep.subr.mxu0 0.0
    %1189 = vmatpush1.msra.mxu0 0.0
    %1190 = vmatprep.subr.mxu0 0.0
    %1191 = vmatpush1.msra.mxu0 0.0
    %1192 = vmatprep.subr.mxu0 0.0
    %1193 = vmatpush1.msra.mxu0 0.0
    %1194 = vmatprep.subr.mxu0 0.0
    %1195 = vmatpush1.msra.mxu0 0.0
    %1196 = vmatprep.mubr.f32.mxu0 0.0
    %1197 = vmatmul.mubr.f32.gmra.mrb[0].mxu0 %v1127
    %v1198 = vpop.f32.mrb[0].mxu0
    %v1199 = vadd.f32 %v1125, %v1198
    %v1200 = vpop.f32.mrb[0].mxu0
    %1201 = vmatprep.mubr.f32.mxu0 0.0
    %1202 = vmatmul.mubr.f32.gmra.mrb[0].mxu0 %v1130
    %v1203 = vpop.f32.mrb[0].mxu0
    %v1204 = vadd.f32 %v1125, %v1203
    %v1205 = vpop.f32.mrb[0].mxu0
    %1206 = vdwg.mxu0
    %v1207 = vmul.f32 %v1199, 0.5
    %v1208 = vmul.f32 %v1204, 0.5
    %v1209 = vmul.f32 %v1199, 0.044715
    %v1210 = vmul.f32 %v1204, 0.044715
    %v1211 = vmul.f32 %v1209, %v1199
    %v1212 = vmul.f32 %v1210, %v1204
    %v1213 = vmul.f32 %v1211, %v1199
    %v1214 = vmul.f32 %v1212, %v1204
    %v1215 = vadd.f32 %v1199, %v1213
    %v1216 = vadd.f32 %v1204, %v1214
    %v1217 = vmul.f32 %v1215, 0.7978846
    %v1218 = vmul.f32 %v1216, 0.7978846
    %v1219 = vtanh.pop %v1217
    %v1220 = vtanh.pop %v1218
    %v1221 = vadd.f32 %v1219, 1.0
    %v1222 = vadd.f32 %v1220, 1.0
    %v1223 = vmul.f32 %v1207, %v1221
    %v1224 = vmul.f32 %v1208, %v1222
    %v1225 = vld [vmem:[%s6] sm:$0xff]
    %v1226 = vld [vmem:[%s6 + $0x8] sm:$0xff]
    %v1227 = vld [vmem:[%s6 + $0x10] sm:$0xff]
    %v1228 = vld [vmem:[%s6 + $0x18] sm:$0xff]
    %v1229 = vld [vmem:[%s6 + $0x20] sm:$0xff]
    %v1230 = vld [vmem:[%s6 + $0x28] sm:$0xff]
    %v1231 = vld [vmem:[%s6 + $0x30] sm:$0xff]
    %v1232 = vld [vmem:[%s6 + $0x38] sm:$0xff]
    %v1233 = vld [vmem:[%s6 + $0x40] sm:$0xff]
    %v1234 = vld [vmem:[%s6 + $0x48] sm:$0xff]
    %v1235 = vld [vmem:[%s6 + $0x50] sm:$0xff]
    %v1236 = vld [vmem:[%s6 + $0x58] sm:$0xff]
    %v1237 = vld [vmem:[%s6 + $0x60] sm:$0xff]
    %v1238 = vld [vmem:[%s6 + $0x68] sm:$0xff]
    %v1239 = vld [vmem:[%s6 + $0x70] sm:$0xff]
    %v1240 = vld [vmem:[%s6 + $0x78] sm:$0xff]
    %v1241 = vlaneseq
    %v1242 = vshrl.u32 %v1241, 7
    %v1243 = vsub.s32 0, %v1242
    %v1244 = vrot.slane %v34, %v1243
    %1245 = vmatprep.subr.mxu0 0.0
    %1246 = vmatpush1.msra.mxu0 %v1225
    %1247 = vmatprep.subr.mxu0 0.0
    %1248 = vmatpush1.msra.mxu0 %v1226
    %1249 = vmatprep.subr.mxu0 0.0
    %1250 = vmatpush1.msra.mxu0 %v1227
    %1251 = vmatprep.subr.mxu0 0.0
    %1252 = vmatpush1.msra.mxu0 %v1228
    %1253 = vmatprep.subr.mxu0 0.0
    %1254 = vmatpush1.msra.mxu0 %v1229
    %1255 = vmatprep.subr.mxu0 0.0
    %1256 = vmatpush1.msra.mxu0 %v1230
    %1257 = vmatprep.subr.mxu0 0.0
    %1258 = vmatpush1.msra.mxu0 %v1231
    %1259 = vmatprep.subr.mxu0 0.0
    %1260 = vmatpush1.msra.mxu0 %v1232
    %1261 = vmatprep.subr.mxu0 0.0
    %1262 = vmatpush1.msra.mxu0 %v1233
    %1263 = vmatprep.subr.mxu0 0.0
    %1264 = vmatpush1.msra.mxu0 %v1234
    %1265 = vmatprep.subr.mxu0 0.0
    %1266 = vmatpush1.msra.mxu0 %v1235
    %1267 = vmatprep.subr.mxu0 0.0
    %1268 = vmatpush1.msra.mxu0 %v1236
    %1269 = vmatprep.subr.mxu0 0.0
    %1270 = vmatpush1.msra.mxu0 %v1237
    %1271 = vmatprep.subr.mxu0 0.0
    %1272 = vmatpush1.msra.mxu0 %v1238
    %1273 = vmatprep.subr.mxu0 0.0
    %1274 = vmatpush1.msra.mxu0 %v1239
    %1275 = vmatprep.subr.mxu0 0.0
    %1276 = vmatpush1.msra.mxu0 %v1240
    %1277 = vmatprep.subr.mxu0 0.0
    %1278 = vmatpush1.msra.mxu0 0.0
    %1279 = vmatprep.subr.mxu0 0.0
    %1280 = vmatpush1.msra.mxu0 0.0
    %1281 = vmatprep.subr.mxu0 0.0
    %1282 = vmatpush1.msra.mxu0 0.0
    %1283 = vmatprep.subr.mxu0 0.0
    %1284 = vmatpush1.msra.mxu0 0.0
    %1285 = vmatprep.subr.mxu0 0.0
    %1286 = vmatpush1.msra.mxu0 0.0
    %1287 = vmatprep.subr.mxu0 0.0
    %1288 = vmatpush1.msra.mxu0 0.0
    %1289 = vmatprep.subr.mxu0 0.0
    %1290 = vmatpush1.msra.mxu0 0.0
    %1291 = vmatprep.subr.mxu0 0.0
    %1292 = vmatpush1.msra.mxu0 0.0
    %1293 = vmatprep.subr.mxu0 0.0
    %1294 = vmatpush1.msra.mxu0 0.0
    %1295 = vmatprep.subr.mxu0 0.0
    %1296 = vmatpush1.msra.mxu0 0.0
    %1297 = vmatprep.subr.mxu0 0.0
    %1298 = vmatpush1.msra.mxu0 0.0
    %1299 = vmatprep.subr.mxu0 0.0
    %1300 = vmatpush1.msra.mxu0 0.0
    %1301 = vmatprep.subr.mxu0 0.0
    %1302 = vmatpush1.msra.mxu0 0.0
    %1303 = vmatprep.subr.mxu0 0.0
    %1304 = vmatpush1.msra.mxu0 0.0
    %1305 = vmatprep.subr.mxu0 0.0
    %1306 = vmatpush1.msra.mxu0 0.0
    %1307 = vmatprep.subr.mxu0 0.0
    %1308 = vmatpush1.msra.mxu0 0.0
    %1309 = vmatprep.mubr.f32.mxu0 0.0
    %1310 = vmatmul.mubr.f32.gmra.mrb[0].mxu0 %v1223
    %v1311 = vpop.f32.mrb[0].mxu0
    %v1312 = vadd.f32 %v1244, %v1311
    %v1313 = vpop.f32.mrb[0].mxu0
    %1314 = vmatprep.mubr.f32.mxu0 0.0
    %1315 = vmatmul.mubr.f32.gmra.mrb[0].mxu0 %v1224
    %v1316 = vpop.f32.mrb[0].mxu0
    %v1317 = vadd.f32 %v1244, %v1316
    %v1318 = vpop.f32.mrb[0].mxu0
    %1319 = vdwg.mxu0
    %v1320 = vadd.f32 %v1078, %v1312
    %v1321 = vadd.f32 %v1079, %v1317
    %1322 = vst.msk [vmem:[#allocation3] sm:$0xff] %vm37, %v1320
    %1323 = vst.msk [vmem:[#allocation3 + $0x8] sm:$0xff] %vm37, %v1321
    // Predicated region
    $region30: #{tpu_custom_call.1} parent=1 // pred_check
      _
    $region31: #{tpu_custom_call.1} parent=1 // pred_check_branch
      %1325 = sbr.rel (0) target = $region33
    $region32: #{tpu_custom_call.1} parent=1 // pred_region
      %s1327 = ssub.s32 256, 256
      %1328 = vsyncadd [#allocation4], %s1327
      %s1329 = sshll.u32 [#allocation3], 4
      %s1330 = int_to_ptr.vmem [resolvable:$true] %s1329
      %1335 = dma.vmem_to_hbm [thread:$0]  %s1330, 256, %s7, [#allocation4], 128, 128, 8
    $region33: #{tpu_custom_call.1} parent=1 // pred_fallthru
      _
    // Predicated region
    $region34: #{tpu_custom_call.1} parent=1 // pred_check
      _
    $region35: #{tpu_custom_call.1} parent=1 // pred_check_branch
      %1337 = sbr.rel (0) target = $region37
    $region36: #{tpu_custom_call.1} parent=1 // pred_region
      %1338 = dma.done [#allocation4], 256
    $region37: #{tpu_custom_call.1} parent=1 // pred_fallthru
      _
    %1339 = vsyncpa [#allocation4], 1

</llo_original>
